<compile_context>
chip_gen: v7x
topology: tpu7x:2x2x1
jax: 0.10.0
libtpu: 0.0.40
codegen_flags: <defaults>
</compile_context>

<pallas_src>
import functools

import jax
import jax.numpy as jnp
from jax.experimental import pallas as pl
from jax.experimental.pallas import tpu as pltpu


# ----------------------------------------------------------------------------
# Kernel: full forward pass (num_layers LSTM layers + Linear head), time-major.
# ----------------------------------------------------------------------------
def fused_lstm_head_kernel(x_ref, *refs, num_layers, hidden_size):
    """x_ref : (T, B, D_in) f32 VMEM
    refs  : per layer [wih (D_l,4H) bf16, whh (H,4H) bf16, b (1,4H) f32],
            then w_out (H,O) bf16, b_out (1,O) f32,
            then out_ref (T,B,O) f32, then h_seq scratch (T,B,H) f32.
    """
    layer_refs = refs[: 3 * num_layers]
    w_out_ref, b_out_ref, out_ref, h_seq_ref = refs[3 * num_layers:]

    T, B, _ = x_ref.shape
    H = hidden_size

    for layer in range(num_layers):
        wih = layer_refs[3 * layer + 0][...]                    # bf16 (D_l, 4H)
        whh = layer_refs[3 * layer + 1][...]                    # bf16 (H, 4H)
        b = layer_refs[3 * layer + 2][...].astype(jnp.float32)  # f32  (1, 4H)

        if layer == 0:
            inp = x_ref[...].astype(jnp.bfloat16)               # (T, B, D_in)
        else:
            inp = h_seq_ref[...].astype(jnp.bfloat16)           # (T, B, H)
        d_in = inp.shape[-1]

        # Hoisted input projection: ONE (T*B, D) x (D, 4H) MXU matmul per layer
        # (no sequential dependency), f32 accumulation.
        gx = (
            jnp.dot(inp.reshape(T * B, d_in), wih,
                    preferred_element_type=jnp.float32) + b
        ).reshape(T, B, 4 * H)

        h = jnp.zeros((B, H), jnp.float32)
        c = jnp.zeros((B, H), jnp.float32)
        for t in range(T):  # static unroll: one small matmul + elementwise per step
            gates = gx[t] + jnp.dot(h.astype(jnp.bfloat16), whh,
                                    preferred_element_type=jnp.float32)
            sig = jax.nn.sigmoid(gates)                         # full (B, 4H) tile
            tnh = jnp.tanh(gates)                               # full (B, 4H) tile
            i = sig[:, 0 * H:1 * H]
            f = sig[:, 1 * H:2 * H]
            g = tnh[:, 2 * H:3 * H]
            o = sig[:, 3 * H:4 * H]
            c = f * c + i * g
            h = o * jnp.tanh(c)
            h_seq_ref[t] = h                                    # stays in VMEM

    # Fused Linear head: one (T*B, H) x (H, O) matmul on the VMEM-resident h.
    h_all = h_seq_ref[...].astype(jnp.bfloat16).reshape(T * B, H)
    y = jnp.dot(h_all, w_out_ref[...],
                preferred_element_type=jnp.float32) + b_out_ref[...]
    out_ref[...] = y.reshape(T, B, -1).astype(out_ref.dtype)


# ----------------------------------------------------------------------------
# Wrapper
# ----------------------------------------------------------------------------
def pack_params(params):
    """One-time (outside jit) weight packing: transpose, fuse biases, cast bf16."""
    packed = {"layers": []}
    for layer in params["lstm"]:
        packed["layers"].append(dict(
            wih=jnp.asarray(layer["w_ih"].T, jnp.bfloat16),          # (D_l, 4H)
            whh=jnp.asarray(layer["w_hh"].T, jnp.bfloat16),          # (H, 4H)
            b=jnp.asarray((layer["b_ih"] + layer["b_hh"])[None, :],  # (1, 4H)
                          jnp.float32),
        ))
    packed["w_out"] = jnp.asarray(params["linear"]["w"].T, jnp.bfloat16)  # (H, O)
    packed["b_out"] = jnp.asarray(params["linear"]["b"][None, :], jnp.float32)
    return packed


def model_forward(x, packed):
    """x: (B, T, input_size) f32 -> (B, T, output_size) f32 (matches PyTorch)."""
    B, T, _ = x.shape
    layers = packed["layers"]
    num_layers = len(layers)
    H = layers[0]["whh"].shape[0]
    O = packed["w_out"].shape[1]

    # Time-major for the recurrence.  Only the raw (tiny) input / final output
    # get transposed; the hidden sequence never leaves VMEM between layers.
    x_tm = jnp.transpose(x, (1, 0, 2)).astype(jnp.float32)

    flat = []
    for layer in layers:
        flat += [layer["wih"], layer["whh"], layer["b"]]
    flat += [packed["w_out"], packed["b_out"]]

    vmem = pl.BlockSpec(memory_space=pltpu.MemorySpace.VMEM)
    y_tm = pl.pallas_call(
        functools.partial(fused_lstm_head_kernel,
                          num_layers=num_layers, hidden_size=H),
        out_shape=jax.ShapeDtypeStruct((T, B, O), jnp.float32),
        in_specs=[vmem] * (1 + len(flat)),
        out_specs=vmem,
        scratch_shapes=[pltpu.VMEM((T, B, H), jnp.float32)],
    )(x_tm, *flat)
    return jnp.transpose(y_tm, (1, 0, 2))


# ----------------------------------------------------------------------------
# Deterministic parameter init (PyTorch-style uniform(-1/sqrt(H), 1/sqrt(H)))
# ----------------------------------------------------------------------------
def init_params(key, input_size, hidden_size, output_size, num_layers):
    k = 1.0 / jnp.sqrt(hidden_size)
    params = {"lstm": [], "linear": {}}
    for layer in range(num_layers):
        d_in = input_size if layer == 0 else hidden_size
        key, k1, k2, k3, k4 = jax.random.split(key, 5)
        params["lstm"].append(dict(
            w_ih=jax.random.uniform(k1, (4 * hidden_size, d_in), jnp.float32, -k, k),
            w_hh=jax.random.uniform(k2, (4 * hidden_size, hidden_size), jnp.float32, -k, k),
            b_ih=jax.random.uniform(k3, (4 * hidden_size,), jnp.float32, -k, k),
            b_hh=jax.random.uniform(k4, (4 * hidden_size,), jnp.float32, -k, k),
        ))
    key, k1, k2 = jax.random.split(key, 3)
    params["linear"]["w"] = jax.random.uniform(k1, (output_size, hidden_size), jnp.float32, -k, k)
    params["linear"]["b"] = jax.random.uniform(k2, (output_size,), jnp.float32, -k, k)
    return params


# ----------------------------------------------------------------------------
# Pure-JAX f32 reference (true module semantics) for the sanity check.
# ----------------------------------------------------------------------------
def reference_forward(x, params):
    B, T, _ = x.shape
    h_seq = x.astype(jnp.float32)
    for layer in params["lstm"]:
        H = layer["w_hh"].shape[1]
        wih_t, whh_t = layer["w_ih"].T, layer["w_hh"].T
        b = layer["b_ih"] + layer["b_hh"]
        h = jnp.zeros((B, H), jnp.float32)
        c = jnp.zeros((B, H), jnp.float32)
        outs = []
        for t in range(T):
            gates = h_seq[:, t, :] @ wih_t + h @ whh_t + b
            i = jax.nn.sigmoid(gates[:, 0 * H:1 * H])
            f = jax.nn.sigmoid(gates[:, 1 * H:2 * H])
            g = jnp.tanh(gates[:, 2 * H:3 * H])
            o = jax.nn.sigmoid(gates[:, 3 * H:4 * H])
            c = f * c + i * g
            h = o * jnp.tanh(c)
            outs.append(h)
        h_seq = jnp.stack(outs, axis=1)
    return h_seq @ params["linear"]["w"].T + params["linear"]["b"]


# ----------------------------------------------------------------------------
if __name__ == "__main__":
    input_size, hidden_size, output_size, num_layers = 4, 32, 8, 2
    batch, seq = 2, 8

    key = jax.random.PRNGKey(0)
    key, pkey, xkey = jax.random.split(key, 3)
    params = init_params(pkey, input_size, hidden_size, output_size, num_layers)
    packed = pack_params(params)  # one-time packing, outside the jitted forward
    x = jax.random.normal(xkey, (batch, seq, input_size), jnp.float32)

    out = jax.jit(model_forward)(x, packed)
    out = jax.block_until_ready(out)

    ref = reference_forward(x, params)
    assert out.shape == (batch, seq, output_size), out.shape
    # Tolerance accounts for bf16 MXU inputs (f32 accumulation / f32 state).
    assert jnp.allclose(out, ref, atol=3e-2, rtol=3e-2), \
        float(jnp.max(jnp.abs(out - ref)))

    print("KERNEL_OK")
</pallas_src>

<mosaic_0001>
module attributes {stable_mosaic.version = 11 : i64} {
  func.func @fused_lstm_head_kernel(%arg0: memref<8x2x4xf32, #tpu.memory_space<vmem>>, %arg1: memref<4x128xbf16, #tpu.memory_space<vmem>>, %arg2: memref<32x128xbf16, #tpu.memory_space<vmem>>, %arg3: memref<1x128xf32, #tpu.memory_space<vmem>>, %arg4: memref<32x128xbf16, #tpu.memory_space<vmem>>, %arg5: memref<32x128xbf16, #tpu.memory_space<vmem>>, %arg6: memref<1x128xf32, #tpu.memory_space<vmem>>, %arg7: memref<32x8xbf16, #tpu.memory_space<vmem>>, %arg8: memref<1x8xf32, #tpu.memory_space<vmem>>, %arg9: memref<8x2x8xf32, #tpu.memory_space<vmem>>, %arg10: memref<8x2x32xf32, #tpu.memory_space<vmem>>) attributes {dimension_semantics = [], scalar_prefetch = 0 : i64, scratch_operands = 1 : i64, tpu.core_type = #tpu.core_type<tc>} {
    %c0 = arith.constant 0 : index
    %c0_0 = arith.constant 0 : index
    %0 = vector.load %arg1[%c0, %c0_0] : memref<4x128xbf16, #tpu.memory_space<vmem>>, vector<4x128xbf16>
    %c0_1 = arith.constant 0 : index
    %c0_2 = arith.constant 0 : index
    %1 = vector.load %arg2[%c0_1, %c0_2] : memref<32x128xbf16, #tpu.memory_space<vmem>>, vector<32x128xbf16>
    %c0_3 = arith.constant 0 : index
    %c0_4 = arith.constant 0 : index
    %2 = vector.load %arg3[%c0_3, %c0_4] : memref<1x128xf32, #tpu.memory_space<vmem>>, vector<1x128xf32>
    %c0_5 = arith.constant 0 : index
    %c0_6 = arith.constant 0 : index
    %c0_7 = arith.constant 0 : index
    %3 = vector.load %arg0[%c0_5, %c0_6, %c0_7] : memref<8x2x4xf32, #tpu.memory_space<vmem>>, vector<8x2x4xf32>
    %4 = arith.truncf %3 : vector<8x2x4xf32> to vector<8x2x4xbf16>
    %5 = vector.shape_cast %4 : vector<8x2x4xbf16> to vector<16x4xbf16>
    %cst = arith.constant dense<0.000000e+00> : vector<16x128xf32>
    %6 = tpu.matmul %5, %0, %cst {dimension_numbers = #tpu.dot_dimension_numbers<[1], [0], [0], [1], [0, 0, 1, 1], [], []>} : vector<16x4xbf16>, vector<4x128xbf16>, vector<16x128xf32> -> vector<16x128xf32>
    %7 = vector.broadcast %2 : vector<1x128xf32> to vector<16x128xf32>
    %8 = arith.addf %6, %7 : vector<16x128xf32>
    %9 = vector.shape_cast %8 : vector<16x128xf32> to vector<8x2x128xf32>
    %cst_8 = arith.constant 0.000000e+00 : f32
    %10 = vector.broadcast %cst_8 : f32 to vector<2x32xf32>
    %cst_9 = arith.constant 0.000000e+00 : f32
    %11 = vector.broadcast %cst_9 : f32 to vector<2x32xf32>
    %12 = vector.extract_strided_slice %9 {offsets = [0, 0, 0], sizes = [1, 2, 128], strides = [1, 1, 1]} : vector<8x2x128xf32> to vector<1x2x128xf32>
    %13 = vector.shape_cast %12 : vector<1x2x128xf32> to vector<2x128xf32>
    %14 = arith.truncf %10 : vector<2x32xf32> to vector<2x32xbf16>
    %cst_10 = arith.constant dense<0.000000e+00> : vector<2x128xf32>
    %15 = tpu.matmul %14, %1, %cst_10 {dimension_numbers = #tpu.dot_dimension_numbers<[1], [0], [0], [1], [0, 0, 1, 1], [], []>} : vector<2x32xbf16>, vector<32x128xbf16>, vector<2x128xf32> -> vector<2x128xf32>
    %16 = arith.addf %13, %15 : vector<2x128xf32>
    %17 = arith.negf %16 : vector<2x128xf32>
    %18 = math.exp %17 : vector<2x128xf32>
    %cst_11 = arith.constant 1.000000e+00 : f32
    %19 = vector.broadcast %cst_11 : f32 to vector<2x128xf32>
    %20 = arith.addf %19, %18 : vector<2x128xf32>
    %21 = arith.divf %19, %20 : vector<2x128xf32>
    %22 = math.tanh %16 : vector<2x128xf32>
    %23 = vector.extract_strided_slice %21 {offsets = [0, 0], sizes = [2, 32], strides = [1, 1]} : vector<2x128xf32> to vector<2x32xf32>
    %24 = vector.extract_strided_slice %21 {offsets = [0, 32], sizes = [2, 32], strides = [1, 1]} : vector<2x128xf32> to vector<2x32xf32>
    %25 = vector.extract_strided_slice %22 {offsets = [0, 64], sizes = [2, 32], strides = [1, 1]} : vector<2x128xf32> to vector<2x32xf32>
    %26 = vector.extract_strided_slice %21 {offsets = [0, 96], sizes = [2, 32], strides = [1, 1]} : vector<2x128xf32> to vector<2x32xf32>
    %27 = arith.mulf %24, %11 : vector<2x32xf32>
    %28 = arith.mulf %23, %25 : vector<2x32xf32>
    %29 = arith.addf %27, %28 : vector<2x32xf32>
    %30 = math.tanh %29 : vector<2x32xf32>
    %31 = arith.mulf %26, %30 : vector<2x32xf32>
    %c0_12 = arith.constant 0 : index
    %c0_13 = arith.constant 0 : index
    %c0_14 = arith.constant 0 : index
    %32 = vector.load %arg10[%c0_12, %c0_13, %c0_14] : memref<8x2x32xf32, #tpu.memory_space<vmem>>, vector<1x2x32xf32>
    %33 = vector.shape_cast %32 : vector<1x2x32xf32> to vector<2x32xf32>
    %34 = vector.shape_cast %31 : vector<2x32xf32> to vector<1x2x32xf32>
    tpu.vector_store %arg10[%c0_12, %c0_13, %c0_14], %34 {strides = array<i32>} : memref<8x2x32xf32, #tpu.memory_space<vmem>>, vector<1x2x32xf32>,
    %35 = vector.extract_strided_slice %9 {offsets = [1, 0, 0], sizes = [1, 2, 128], strides = [1, 1, 1]} : vector<8x2x128xf32> to vector<1x2x128xf32>
    %36 = vector.shape_cast %35 : vector<1x2x128xf32> to vector<2x128xf32>
    %37 = arith.truncf %31 : vector<2x32xf32> to vector<2x32xbf16>
    %cst_15 = arith.constant dense<0.000000e+00> : vector<2x128xf32>
    %38 = tpu.matmul %37, %1, %cst_15 {dimension_numbers = #tpu.dot_dimension_numbers<[1], [0], [0], [1], [0, 0, 1, 1], [], []>} : vector<2x32xbf16>, vector<32x128xbf16>, vector<2x128xf32> -> vector<2x128xf32>
    %39 = arith.addf %36, %38 : vector<2x128xf32>
    %40 = arith.negf %39 : vector<2x128xf32>
    %41 = math.exp %40 : vector<2x128xf32>
    %cst_16 = arith.constant 1.000000e+00 : f32
    %42 = vector.broadcast %cst_16 : f32 to vector<2x128xf32>
    %43 = arith.addf %42, %41 : vector<2x128xf32>
    %44 = arith.divf %42, %43 : vector<2x128xf32>
    %45 = math.tanh %39 : vector<2x128xf32>
    %46 = vector.extract_strided_slice %44 {offsets = [0, 0], sizes = [2, 32], strides = [1, 1]} : vector<2x128xf32> to vector<2x32xf32>
    %47 = vector.extract_strided_slice %44 {offsets = [0, 32], sizes = [2, 32], strides = [1, 1]} : vector<2x128xf32> to vector<2x32xf32>
    %48 = vector.extract_strided_slice %45 {offsets = [0, 64], sizes = [2, 32], strides = [1, 1]} : vector<2x128xf32> to vector<2x32xf32>
    %49 = vector.extract_strided_slice %44 {offsets = [0, 96], sizes = [2, 32], strides = [1, 1]} : vector<2x128xf32> to vector<2x32xf32>
    %50 = arith.mulf %47, %29 : vector<2x32xf32>
    %51 = arith.mulf %46, %48 : vector<2x32xf32>
    %52 = arith.addf %50, %51 : vector<2x32xf32>
    %53 = math.tanh %52 : vector<2x32xf32>
    %54 = arith.mulf %49, %53 : vector<2x32xf32>
    %c1 = arith.constant 1 : index
    %c0_17 = arith.constant 0 : index
    %c0_18 = arith.constant 0 : index
    %55 = vector.load %arg10[%c1, %c0_17, %c0_18] : memref<8x2x32xf32, #tpu.memory_space<vmem>>, vector<1x2x32xf32>
    %56 = vector.shape_cast %55 : vector<1x2x32xf32> to vector<2x32xf32>
    %57 = vector.shape_cast %54 : vector<2x32xf32> to vector<1x2x32xf32>
    tpu.vector_store %arg10[%c1, %c0_17, %c0_18], %57 {strides = array<i32>} : memref<8x2x32xf32, #tpu.memory_space<vmem>>, vector<1x2x32xf32>,
    %58 = vector.extract_strided_slice %9 {offsets = [2, 0, 0], sizes = [1, 2, 128], strides = [1, 1, 1]} : vector<8x2x128xf32> to vector<1x2x128xf32>
    %59 = vector.shape_cast %58 : vector<1x2x128xf32> to vector<2x128xf32>
    %60 = arith.truncf %54 : vector<2x32xf32> to vector<2x32xbf16>
    %cst_19 = arith.constant dense<0.000000e+00> : vector<2x128xf32>
    %61 = tpu.matmul %60, %1, %cst_19 {dimension_numbers = #tpu.dot_dimension_numbers<[1], [0], [0], [1], [0, 0, 1, 1], [], []>} : vector<2x32xbf16>, vector<32x128xbf16>, vector<2x128xf32> -> vector<2x128xf32>
    %62 = arith.addf %59, %61 : vector<2x128xf32>
    %63 = arith.negf %62 : vector<2x128xf32>
    %64 = math.exp %63 : vector<2x128xf32>
    %cst_20 = arith.constant 1.000000e+00 : f32
    %65 = vector.broadcast %cst_20 : f32 to vector<2x128xf32>
    %66 = arith.addf %65, %64 : vector<2x128xf32>
    %67 = arith.divf %65, %66 : vector<2x128xf32>
    %68 = math.tanh %62 : vector<2x128xf32>
    %69 = vector.extract_strided_slice %67 {offsets = [0, 0], sizes = [2, 32], strides = [1, 1]} : vector<2x128xf32> to vector<2x32xf32>
    %70 = vector.extract_strided_slice %67 {offsets = [0, 32], sizes = [2, 32], strides = [1, 1]} : vector<2x128xf32> to vector<2x32xf32>
    %71 = vector.extract_strided_slice %68 {offsets = [0, 64], sizes = [2, 32], strides = [1, 1]} : vector<2x128xf32> to vector<2x32xf32>
    %72 = vector.extract_strided_slice %67 {offsets = [0, 96], sizes = [2, 32], strides = [1, 1]} : vector<2x128xf32> to vector<2x32xf32>
    %73 = arith.mulf %70, %52 : vector<2x32xf32>
    %74 = arith.mulf %69, %71 : vector<2x32xf32>
    %75 = arith.addf %73, %74 : vector<2x32xf32>
    %76 = math.tanh %75 : vector<2x32xf32>
    %77 = arith.mulf %72, %76 : vector<2x32xf32>
    %c2 = arith.constant 2 : index
    %c0_21 = arith.constant 0 : index
    %c0_22 = arith.constant 0 : index
    %78 = vector.load %arg10[%c2, %c0_21, %c0_22] : memref<8x2x32xf32, #tpu.memory_space<vmem>>, vector<1x2x32xf32>
    %79 = vector.shape_cast %78 : vector<1x2x32xf32> to vector<2x32xf32>
    %80 = vector.shape_cast %77 : vector<2x32xf32> to vector<1x2x32xf32>
    tpu.vector_store %arg10[%c2, %c0_21, %c0_22], %80 {strides = array<i32>} : memref<8x2x32xf32, #tpu.memory_space<vmem>>, vector<1x2x32xf32>,
    %81 = vector.extract_strided_slice %9 {offsets = [3, 0, 0], sizes = [1, 2, 128], strides = [1, 1, 1]} : vector<8x2x128xf32> to vector<1x2x128xf32>
    %82 = vector.shape_cast %81 : vector<1x2x128xf32> to vector<2x128xf32>
    %83 = arith.truncf %77 : vector<2x32xf32> to vector<2x32xbf16>
    %cst_23 = arith.constant dense<0.000000e+00> : vector<2x128xf32>
    %84 = tpu.matmul %83, %1, %cst_23 {dimension_numbers = #tpu.dot_dimension_numbers<[1], [0], [0], [1], [0, 0, 1, 1], [], []>} : vector<2x32xbf16>, vector<32x128xbf16>, vector<2x128xf32> -> vector<2x128xf32>
    %85 = arith.addf %82, %84 : vector<2x128xf32>
    %86 = arith.negf %85 : vector<2x128xf32>
    %87 = math.exp %86 : vector<2x128xf32>
    %cst_24 = arith.constant 1.000000e+00 : f32
    %88 = vector.broadcast %cst_24 : f32 to vector<2x128xf32>
    %89 = arith.addf %88, %87 : vector<2x128xf32>
    %90 = arith.divf %88, %89 : vector<2x128xf32>
    %91 = math.tanh %85 : vector<2x128xf32>
    %92 = vector.extract_strided_slice %90 {offsets = [0, 0], sizes = [2, 32], strides = [1, 1]} : vector<2x128xf32> to vector<2x32xf32>
    %93 = vector.extract_strided_slice %90 {offsets = [0, 32], sizes = [2, 32], strides = [1, 1]} : vector<2x128xf32> to vector<2x32xf32>
    %94 = vector.extract_strided_slice %91 {offsets = [0, 64], sizes = [2, 32], strides = [1, 1]} : vector<2x128xf32> to vector<2x32xf32>
    %95 = vector.extract_strided_slice %90 {offsets = [0, 96], sizes = [2, 32], strides = [1, 1]} : vector<2x128xf32> to vector<2x32xf32>
    %96 = arith.mulf %93, %75 : vector<2x32xf32>
    %97 = arith.mulf %92, %94 : vector<2x32xf32>
    %98 = arith.addf %96, %97 : vector<2x32xf32>
    %99 = math.tanh %98 : vector<2x32xf32>
    %100 = arith.mulf %95, %99 : vector<2x32xf32>
    %c3 = arith.constant 3 : index
    %c0_25 = arith.constant 0 : index
    %c0_26 = arith.constant 0 : index
    %101 = vector.load %arg10[%c3, %c0_25, %c0_26] : memref<8x2x32xf32, #tpu.memory_space<vmem>>, vector<1x2x32xf32>
    %102 = vector.shape_cast %101 : vector<1x2x32xf32> to vector<2x32xf32>
    %103 = vector.shape_cast %100 : vector<2x32xf32> to vector<1x2x32xf32>
    tpu.vector_store %arg10[%c3, %c0_25, %c0_26], %103 {strides = array<i32>} : memref<8x2x32xf32, #tpu.memory_space<vmem>>, vector<1x2x32xf32>,
    %104 = vector.extract_strided_slice %9 {offsets = [4, 0, 0], sizes = [1, 2, 128], strides = [1, 1, 1]} : vector<8x2x128xf32> to vector<1x2x128xf32>
    %105 = vector.shape_cast %104 : vector<1x2x128xf32> to vector<2x128xf32>
    %106 = arith.truncf %100 : vector<2x32xf32> to vector<2x32xbf16>
    %cst_27 = arith.constant dense<0.000000e+00> : vector<2x128xf32>
    %107 = tpu.matmul %106, %1, %cst_27 {dimension_numbers = #tpu.dot_dimension_numbers<[1], [0], [0], [1], [0, 0, 1, 1], [], []>} : vector<2x32xbf16>, vector<32x128xbf16>, vector<2x128xf32> -> vector<2x128xf32>
    %108 = arith.addf %105, %107 : vector<2x128xf32>
    %109 = arith.negf %108 : vector<2x128xf32>
    %110 = math.exp %109 : vector<2x128xf32>
    %cst_28 = arith.constant 1.000000e+00 : f32
    %111 = vector.broadcast %cst_28 : f32 to vector<2x128xf32>
    %112 = arith.addf %111, %110 : vector<2x128xf32>
    %113 = arith.divf %111, %112 : vector<2x128xf32>
    %114 = math.tanh %108 : vector<2x128xf32>
    %115 = vector.extract_strided_slice %113 {offsets = [0, 0], sizes = [2, 32], strides = [1, 1]} : vector<2x128xf32> to vector<2x32xf32>
    %116 = vector.extract_strided_slice %113 {offsets = [0, 32], sizes = [2, 32], strides = [1, 1]} : vector<2x128xf32> to vector<2x32xf32>
    %117 = vector.extract_strided_slice %114 {offsets = [0, 64], sizes = [2, 32], strides = [1, 1]} : vector<2x128xf32> to vector<2x32xf32>
    %118 = vector.extract_strided_slice %113 {offsets = [0, 96], sizes = [2, 32], strides = [1, 1]} : vector<2x128xf32> to vector<2x32xf32>
    %119 = arith.mulf %116, %98 : vector<2x32xf32>
    %120 = arith.mulf %115, %117 : vector<2x32xf32>
    %121 = arith.addf %119, %120 : vector<2x32xf32>
    %122 = math.tanh %121 : vector<2x32xf32>
    %123 = arith.mulf %118, %122 : vector<2x32xf32>
    %c4 = arith.constant 4 : index
    %c0_29 = arith.constant 0 : index
    %c0_30 = arith.constant 0 : index
    %124 = vector.load %arg10[%c4, %c0_29, %c0_30] : memref<8x2x32xf32, #tpu.memory_space<vmem>>, vector<1x2x32xf32>
    %125 = vector.shape_cast %124 : vector<1x2x32xf32> to vector<2x32xf32>
    %126 = vector.shape_cast %123 : vector<2x32xf32> to vector<1x2x32xf32>
    tpu.vector_store %arg10[%c4, %c0_29, %c0_30], %126 {strides = array<i32>} : memref<8x2x32xf32, #tpu.memory_space<vmem>>, vector<1x2x32xf32>,
    %127 = vector.extract_strided_slice %9 {offsets = [5, 0, 0], sizes = [1, 2, 128], strides = [1, 1, 1]} : vector<8x2x128xf32> to vector<1x2x128xf32>
    %128 = vector.shape_cast %127 : vector<1x2x128xf32> to vector<2x128xf32>
    %129 = arith.truncf %123 : vector<2x32xf32> to vector<2x32xbf16>
    %cst_31 = arith.constant dense<0.000000e+00> : vector<2x128xf32>
    %130 = tpu.matmul %129, %1, %cst_31 {dimension_numbers = #tpu.dot_dimension_numbers<[1], [0], [0], [1], [0, 0, 1, 1], [], []>} : vector<2x32xbf16>, vector<32x128xbf16>, vector<2x128xf32> -> vector<2x128xf32>
    %131 = arith.addf %128, %130 : vector<2x128xf32>
    %132 = arith.negf %131 : vector<2x128xf32>
    %133 = math.exp %132 : vector<2x128xf32>
    %cst_32 = arith.constant 1.000000e+00 : f32
    %134 = vector.broadcast %cst_32 : f32 to vector<2x128xf32>
    %135 = arith.addf %134, %133 : vector<2x128xf32>
    %136 = arith.divf %134, %135 : vector<2x128xf32>
    %137 = math.tanh %131 : vector<2x128xf32>
    %138 = vector.extract_strided_slice %136 {offsets = [0, 0], sizes = [2, 32], strides = [1, 1]} : vector<2x128xf32> to vector<2x32xf32>
    %139 = vector.extract_strided_slice %136 {offsets = [0, 32], sizes = [2, 32], strides = [1, 1]} : vector<2x128xf32> to vector<2x32xf32>
    %140 = vector.extract_strided_slice %137 {offsets = [0, 64], sizes = [2, 32], strides = [1, 1]} : vector<2x128xf32> to vector<2x32xf32>
    %141 = vector.extract_strided_slice %136 {offsets = [0, 96], sizes = [2, 32], strides = [1, 1]} : vector<2x128xf32> to vector<2x32xf32>
    %142 = arith.mulf %139, %121 : vector<2x32xf32>
    %143 = arith.mulf %138, %140 : vector<2x32xf32>
    %144 = arith.addf %142, %143 : vector<2x32xf32>
    %145 = math.tanh %144 : vector<2x32xf32>
    %146 = arith.mulf %141, %145 : vector<2x32xf32>
    %c5 = arith.constant 5 : index
    %c0_33 = arith.constant 0 : index
    %c0_34 = arith.constant 0 : index
    %147 = vector.load %arg10[%c5, %c0_33, %c0_34] : memref<8x2x32xf32, #tpu.memory_space<vmem>>, vector<1x2x32xf32>
    %148 = vector.shape_cast %147 : vector<1x2x32xf32> to vector<2x32xf32>
    %149 = vector.shape_cast %146 : vector<2x32xf32> to vector<1x2x32xf32>
    tpu.vector_store %arg10[%c5, %c0_33, %c0_34], %149 {strides = array<i32>} : memref<8x2x32xf32, #tpu.memory_space<vmem>>, vector<1x2x32xf32>,
    %150 = vector.extract_strided_slice %9 {offsets = [6, 0, 0], sizes = [1, 2, 128], strides = [1, 1, 1]} : vector<8x2x128xf32> to vector<1x2x128xf32>
    %151 = vector.shape_cast %150 : vector<1x2x128xf32> to vector<2x128xf32>
    %152 = arith.truncf %146 : vector<2x32xf32> to vector<2x32xbf16>
    %cst_35 = arith.constant dense<0.000000e+00> : vector<2x128xf32>
    %153 = tpu.matmul %152, %1, %cst_35 {dimension_numbers = #tpu.dot_dimension_numbers<[1], [0], [0], [1], [0, 0, 1, 1], [], []>} : vector<2x32xbf16>, vector<32x128xbf16>, vector<2x128xf32> -> vector<2x128xf32>
    %154 = arith.addf %151, %153 : vector<2x128xf32>
    %155 = arith.negf %154 : vector<2x128xf32>
    %156 = math.exp %155 : vector<2x128xf32>
    %cst_36 = arith.constant 1.000000e+00 : f32
    %157 = vector.broadcast %cst_36 : f32 to vector<2x128xf32>
    %158 = arith.addf %157, %156 : vector<2x128xf32>
    %159 = arith.divf %157, %158 : vector<2x128xf32>
    %160 = math.tanh %154 : vector<2x128xf32>
    %161 = vector.extract_strided_slice %159 {offsets = [0, 0], sizes = [2, 32], strides = [1, 1]} : vector<2x128xf32> to vector<2x32xf32>
    %162 = vector.extract_strided_slice %159 {offsets = [0, 32], sizes = [2, 32], strides = [1, 1]} : vector<2x128xf32> to vector<2x32xf32>
    %163 = vector.extract_strided_slice %160 {offsets = [0, 64], sizes = [2, 32], strides = [1, 1]} : vector<2x128xf32> to vector<2x32xf32>
    %164 = vector.extract_strided_slice %159 {offsets = [0, 96], sizes = [2, 32], strides = [1, 1]} : vector<2x128xf32> to vector<2x32xf32>
    %165 = arith.mulf %162, %144 : vector<2x32xf32>
    %166 = arith.mulf %161, %163 : vector<2x32xf32>
    %167 = arith.addf %165, %166 : vector<2x32xf32>
    %168 = math.tanh %167 : vector<2x32xf32>
    %169 = arith.mulf %164, %168 : vector<2x32xf32>
    %c6 = arith.constant 6 : index
    %c0_37 = arith.constant 0 : index
    %c0_38 = arith.constant 0 : index
    %170 = vector.load %arg10[%c6, %c0_37, %c0_38] : memref<8x2x32xf32, #tpu.memory_space<vmem>>, vector<1x2x32xf32>
    %171 = vector.shape_cast %170 : vector<1x2x32xf32> to vector<2x32xf32>
    %172 = vector.shape_cast %169 : vector<2x32xf32> to vector<1x2x32xf32>
    tpu.vector_store %arg10[%c6, %c0_37, %c0_38], %172 {strides = array<i32>} : memref<8x2x32xf32, #tpu.memory_space<vmem>>, vector<1x2x32xf32>,
    %173 = vector.extract_strided_slice %9 {offsets = [7, 0, 0], sizes = [1, 2, 128], strides = [1, 1, 1]} : vector<8x2x128xf32> to vector<1x2x128xf32>
    %174 = vector.shape_cast %173 : vector<1x2x128xf32> to vector<2x128xf32>
    %175 = arith.truncf %169 : vector<2x32xf32> to vector<2x32xbf16>
    %cst_39 = arith.constant dense<0.000000e+00> : vector<2x128xf32>
    %176 = tpu.matmul %175, %1, %cst_39 {dimension_numbers = #tpu.dot_dimension_numbers<[1], [0], [0], [1], [0, 0, 1, 1], [], []>} : vector<2x32xbf16>, vector<32x128xbf16>, vector<2x128xf32> -> vector<2x128xf32>
    %177 = arith.addf %174, %176 : vector<2x128xf32>
    %178 = arith.negf %177 : vector<2x128xf32>
    %179 = math.exp %178 : vector<2x128xf32>
    %cst_40 = arith.constant 1.000000e+00 : f32
    %180 = vector.broadcast %cst_40 : f32 to vector<2x128xf32>
    %181 = arith.addf %180, %179 : vector<2x128xf32>
    %182 = arith.divf %180, %181 : vector<2x128xf32>
    %183 = math.tanh %177 : vector<2x128xf32>
    %184 = vector.extract_strided_slice %182 {offsets = [0, 0], sizes = [2, 32], strides = [1, 1]} : vector<2x128xf32> to vector<2x32xf32>
    %185 = vector.extract_strided_slice %182 {offsets = [0, 32], sizes = [2, 32], strides = [1, 1]} : vector<2x128xf32> to vector<2x32xf32>
    %186 = vector.extract_strided_slice %183 {offsets = [0, 64], sizes = [2, 32], strides = [1, 1]} : vector<2x128xf32> to vector<2x32xf32>
    %187 = vector.extract_strided_slice %182 {offsets = [0, 96], sizes = [2, 32], strides = [1, 1]} : vector<2x128xf32> to vector<2x32xf32>
    %188 = arith.mulf %185, %167 : vector<2x32xf32>
    %189 = arith.mulf %184, %186 : vector<2x32xf32>
    %190 = arith.addf %188, %189 : vector<2x32xf32>
    %191 = math.tanh %190 : vector<2x32xf32>
    %192 = arith.mulf %187, %191 : vector<2x32xf32>
    %c7 = arith.constant 7 : index
    %c0_41 = arith.constant 0 : index
    %c0_42 = arith.constant 0 : index
    %193 = vector.load %arg10[%c7, %c0_41, %c0_42] : memref<8x2x32xf32, #tpu.memory_space<vmem>>, vector<1x2x32xf32>
    %194 = vector.shape_cast %193 : vector<1x2x32xf32> to vector<2x32xf32>
    %195 = vector.shape_cast %192 : vector<2x32xf32> to vector<1x2x32xf32>
    tpu.vector_store %arg10[%c7, %c0_41, %c0_42], %195 {strides = array<i32>} : memref<8x2x32xf32, #tpu.memory_space<vmem>>, vector<1x2x32xf32>,
    %c0_43 = arith.constant 0 : index
    %c0_44 = arith.constant 0 : index
    %196 = vector.load %arg4[%c0_43, %c0_44] : memref<32x128xbf16, #tpu.memory_space<vmem>>, vector<32x128xbf16>
    %c0_45 = arith.constant 0 : index
    %c0_46 = arith.constant 0 : index
    %197 = vector.load %arg5[%c0_45, %c0_46] : memref<32x128xbf16, #tpu.memory_space<vmem>>, vector<32x128xbf16>
    %c0_47 = arith.constant 0 : index
    %c0_48 = arith.constant 0 : index
    %198 = vector.load %arg6[%c0_47, %c0_48] : memref<1x128xf32, #tpu.memory_space<vmem>>, vector<1x128xf32>
    %c0_49 = arith.constant 0 : index
    %c0_50 = arith.constant 0 : index
    %c0_51 = arith.constant 0 : index
    %199 = vector.load %arg10[%c0_49, %c0_50, %c0_51] : memref<8x2x32xf32, #tpu.memory_space<vmem>>, vector<8x2x32xf32>
    %200 = arith.truncf %199 : vector<8x2x32xf32> to vector<8x2x32xbf16>
    %201 = vector.shape_cast %200 : vector<8x2x32xbf16> to vector<16x32xbf16>
    %cst_52 = arith.constant dense<0.000000e+00> : vector<16x128xf32>
    %202 = tpu.matmul %201, %196, %cst_52 {dimension_numbers = #tpu.dot_dimension_numbers<[1], [0], [0], [1], [0, 0, 1, 1], [], []>} : vector<16x32xbf16>, vector<32x128xbf16>, vector<16x128xf32> -> vector<16x128xf32>
    %203 = vector.broadcast %198 : vector<1x128xf32> to vector<16x128xf32>
    %204 = arith.addf %202, %203 : vector<16x128xf32>
    %205 = vector.shape_cast %204 : vector<16x128xf32> to vector<8x2x128xf32>
    %cst_53 = arith.constant 0.000000e+00 : f32
    %206 = vector.broadcast %cst_53 : f32 to vector<2x32xf32>
    %cst_54 = arith.constant 0.000000e+00 : f32
    %207 = vector.broadcast %cst_54 : f32 to vector<2x32xf32>
    %208 = vector.extract_strided_slice %205 {offsets = [0, 0, 0], sizes = [1, 2, 128], strides = [1, 1, 1]} : vector<8x2x128xf32> to vector<1x2x128xf32>
    %209 = vector.shape_cast %208 : vector<1x2x128xf32> to vector<2x128xf32>
    %210 = arith.truncf %206 : vector<2x32xf32> to vector<2x32xbf16>
    %cst_55 = arith.constant dense<0.000000e+00> : vector<2x128xf32>
    %211 = tpu.matmul %210, %197, %cst_55 {dimension_numbers = #tpu.dot_dimension_numbers<[1], [0], [0], [1], [0, 0, 1, 1], [], []>} : vector<2x32xbf16>, vector<32x128xbf16>, vector<2x128xf32> -> vector<2x128xf32>
    %212 = arith.addf %209, %211 : vector<2x128xf32>
    %213 = arith.negf %212 : vector<2x128xf32>
    %214 = math.exp %213 : vector<2x128xf32>
    %cst_56 = arith.constant 1.000000e+00 : f32
    %215 = vector.broadcast %cst_56 : f32 to vector<2x128xf32>
    %216 = arith.addf %215, %214 : vector<2x128xf32>
    %217 = arith.divf %215, %216 : vector<2x128xf32>
    %218 = math.tanh %212 : vector<2x128xf32>
    %219 = vector.extract_strided_slice %217 {offsets = [0, 0], sizes = [2, 32], strides = [1, 1]} : vector<2x128xf32> to vector<2x32xf32>
    %220 = vector.extract_strided_slice %217 {offsets = [0, 32], sizes = [2, 32], strides = [1, 1]} : vector<2x128xf32> to vector<2x32xf32>
    %221 = vector.extract_strided_slice %218 {offsets = [0, 64], sizes = [2, 32], strides = [1, 1]} : vector<2x128xf32> to vector<2x32xf32>
    %222 = vector.extract_strided_slice %217 {offsets = [0, 96], sizes = [2, 32], strides = [1, 1]} : vector<2x128xf32> to vector<2x32xf32>
    %223 = arith.mulf %220, %207 : vector<2x32xf32>
    %224 = arith.mulf %219, %221 : vector<2x32xf32>
    %225 = arith.addf %223, %224 : vector<2x32xf32>
    %226 = math.tanh %225 : vector<2x32xf32>
    %227 = arith.mulf %222, %226 : vector<2x32xf32>
    %c0_57 = arith.constant 0 : index
    %c0_58 = arith.constant 0 : index
    %c0_59 = arith.constant 0 : index
    %228 = vector.load %arg10[%c0_57, %c0_58, %c0_59] : memref<8x2x32xf32, #tpu.memory_space<vmem>>, vector<1x2x32xf32>
    %229 = vector.shape_cast %228 : vector<1x2x32xf32> to vector<2x32xf32>
    %230 = vector.shape_cast %227 : vector<2x32xf32> to vector<1x2x32xf32>
    tpu.vector_store %arg10[%c0_57, %c0_58, %c0_59], %230 {strides = array<i32>} : memref<8x2x32xf32, #tpu.memory_space<vmem>>, vector<1x2x32xf32>,
    %231 = vector.extract_strided_slice %205 {offsets = [1, 0, 0], sizes = [1, 2, 128], strides = [1, 1, 1]} : vector<8x2x128xf32> to vector<1x2x128xf32>
    %232 = vector.shape_cast %231 : vector<1x2x128xf32> to vector<2x128xf32>
    %233 = arith.truncf %227 : vector<2x32xf32> to vector<2x32xbf16>
    %cst_60 = arith.constant dense<0.000000e+00> : vector<2x128xf32>
    %234 = tpu.matmul %233, %197, %cst_60 {dimension_numbers = #tpu.dot_dimension_numbers<[1], [0], [0], [1], [0, 0, 1, 1], [], []>} : vector<2x32xbf16>, vector<32x128xbf16>, vector<2x128xf32> -> vector<2x128xf32>
    %235 = arith.addf %232, %234 : vector<2x128xf32>
    %236 = arith.negf %235 : vector<2x128xf32>
    %237 = math.exp %236 : vector<2x128xf32>
    %cst_61 = arith.constant 1.000000e+00 : f32
    %238 = vector.broadcast %cst_61 : f32 to vector<2x128xf32>
    %239 = arith.addf %238, %237 : vector<2x128xf32>
    %240 = arith.divf %238, %239 : vector<2x128xf32>
    %241 = math.tanh %235 : vector<2x128xf32>
    %242 = vector.extract_strided_slice %240 {offsets = [0, 0], sizes = [2, 32], strides = [1, 1]} : vector<2x128xf32> to vector<2x32xf32>
    %243 = vector.extract_strided_slice %240 {offsets = [0, 32], sizes = [2, 32], strides = [1, 1]} : vector<2x128xf32> to vector<2x32xf32>
    %244 = vector.extract_strided_slice %241 {offsets = [0, 64], sizes = [2, 32], strides = [1, 1]} : vector<2x128xf32> to vector<2x32xf32>
    %245 = vector.extract_strided_slice %240 {offsets = [0, 96], sizes = [2, 32], strides = [1, 1]} : vector<2x128xf32> to vector<2x32xf32>
    %246 = arith.mulf %243, %225 : vector<2x32xf32>
    %247 = arith.mulf %242, %244 : vector<2x32xf32>
    %248 = arith.addf %246, %247 : vector<2x32xf32>
    %249 = math.tanh %248 : vector<2x32xf32>
    %250 = arith.mulf %245, %249 : vector<2x32xf32>
    %c1_62 = arith.constant 1 : index
    %c0_63 = arith.constant 0 : index
    %c0_64 = arith.constant 0 : index
    %251 = vector.load %arg10[%c1_62, %c0_63, %c0_64] : memref<8x2x32xf32, #tpu.memory_space<vmem>>, vector<1x2x32xf32>
    %252 = vector.shape_cast %251 : vector<1x2x32xf32> to vector<2x32xf32>
    %253 = vector.shape_cast %250 : vector<2x32xf32> to vector<1x2x32xf32>
    tpu.vector_store %arg10[%c1_62, %c0_63, %c0_64], %253 {strides = array<i32>} : memref<8x2x32xf32, #tpu.memory_space<vmem>>, vector<1x2x32xf32>,
    %254 = vector.extract_strided_slice %205 {offsets = [2, 0, 0], sizes = [1, 2, 128], strides = [1, 1, 1]} : vector<8x2x128xf32> to vector<1x2x128xf32>
    %255 = vector.shape_cast %254 : vector<1x2x128xf32> to vector<2x128xf32>
    %256 = arith.truncf %250 : vector<2x32xf32> to vector<2x32xbf16>
    %cst_65 = arith.constant dense<0.000000e+00> : vector<2x128xf32>
    %257 = tpu.matmul %256, %197, %cst_65 {dimension_numbers = #tpu.dot_dimension_numbers<[1], [0], [0], [1], [0, 0, 1, 1], [], []>} : vector<2x32xbf16>, vector<32x128xbf16>, vector<2x128xf32> -> vector<2x128xf32>
    %258 = arith.addf %255, %257 : vector<2x128xf32>
    %259 = arith.negf %258 : vector<2x128xf32>
    %260 = math.exp %259 : vector<2x128xf32>
    %cst_66 = arith.constant 1.000000e+00 : f32
    %261 = vector.broadcast %cst_66 : f32 to vector<2x128xf32>
    %262 = arith.addf %261, %260 : vector<2x128xf32>
    %263 = arith.divf %261, %262 : vector<2x128xf32>
    %264 = math.tanh %258 : vector<2x128xf32>
    %265 = vector.extract_strided_slice %263 {offsets = [0, 0], sizes = [2, 32], strides = [1, 1]} : vector<2x128xf32> to vector<2x32xf32>
    %266 = vector.extract_strided_slice %263 {offsets = [0, 32], sizes = [2, 32], strides = [1, 1]} : vector<2x128xf32> to vector<2x32xf32>
    %267 = vector.extract_strided_slice %264 {offsets = [0, 64], sizes = [2, 32], strides = [1, 1]} : vector<2x128xf32> to vector<2x32xf32>
    %268 = vector.extract_strided_slice %263 {offsets = [0, 96], sizes = [2, 32], strides = [1, 1]} : vector<2x128xf32> to vector<2x32xf32>
    %269 = arith.mulf %266, %248 : vector<2x32xf32>
    %270 = arith.mulf %265, %267 : vector<2x32xf32>
    %271 = arith.addf %269, %270 : vector<2x32xf32>
    %272 = math.tanh %271 : vector<2x32xf32>
    %273 = arith.mulf %268, %272 : vector<2x32xf32>
    %c2_67 = arith.constant 2 : index
    %c0_68 = arith.constant 0 : index
    %c0_69 = arith.constant 0 : index
    %274 = vector.load %arg10[%c2_67, %c0_68, %c0_69] : memref<8x2x32xf32, #tpu.memory_space<vmem>>, vector<1x2x32xf32>
    %275 = vector.shape_cast %274 : vector<1x2x32xf32> to vector<2x32xf32>
    %276 = vector.shape_cast %273 : vector<2x32xf32> to vector<1x2x32xf32>
    tpu.vector_store %arg10[%c2_67, %c0_68, %c0_69], %276 {strides = array<i32>} : memref<8x2x32xf32, #tpu.memory_space<vmem>>, vector<1x2x32xf32>,
    %277 = vector.extract_strided_slice %205 {offsets = [3, 0, 0], sizes = [1, 2, 128], strides = [1, 1, 1]} : vector<8x2x128xf32> to vector<1x2x128xf32>
    %278 = vector.shape_cast %277 : vector<1x2x128xf32> to vector<2x128xf32>
    %279 = arith.truncf %273 : vector<2x32xf32> to vector<2x32xbf16>
    %cst_70 = arith.constant dense<0.000000e+00> : vector<2x128xf32>
    %280 = tpu.matmul %279, %197, %cst_70 {dimension_numbers = #tpu.dot_dimension_numbers<[1], [0], [0], [1], [0, 0, 1, 1], [], []>} : vector<2x32xbf16>, vector<32x128xbf16>, vector<2x128xf32> -> vector<2x128xf32>
    %281 = arith.addf %278, %280 : vector<2x128xf32>
    %282 = arith.negf %281 : vector<2x128xf32>
    %283 = math.exp %282 : vector<2x128xf32>
    %cst_71 = arith.constant 1.000000e+00 : f32
    %284 = vector.broadcast %cst_71 : f32 to vector<2x128xf32>
    %285 = arith.addf %284, %283 : vector<2x128xf32>
    %286 = arith.divf %284, %285 : vector<2x128xf32>
    %287 = math.tanh %281 : vector<2x128xf32>
    %288 = vector.extract_strided_slice %286 {offsets = [0, 0], sizes = [2, 32], strides = [1, 1]} : vector<2x128xf32> to vector<2x32xf32>
    %289 = vector.extract_strided_slice %286 {offsets = [0, 32], sizes = [2, 32], strides = [1, 1]} : vector<2x128xf32> to vector<2x32xf32>
    %290 = vector.extract_strided_slice %287 {offsets = [0, 64], sizes = [2, 32], strides = [1, 1]} : vector<2x128xf32> to vector<2x32xf32>
    %291 = vector.extract_strided_slice %286 {offsets = [0, 96], sizes = [2, 32], strides = [1, 1]} : vector<2x128xf32> to vector<2x32xf32>
    %292 = arith.mulf %289, %271 : vector<2x32xf32>
    %293 = arith.mulf %288, %290 : vector<2x32xf32>
    %294 = arith.addf %292, %293 : vector<2x32xf32>
    %295 = math.tanh %294 : vector<2x32xf32>
    %296 = arith.mulf %291, %295 : vector<2x32xf32>
    %c3_72 = arith.constant 3 : index
    %c0_73 = arith.constant 0 : index
    %c0_74 = arith.constant 0 : index
    %297 = vector.load %arg10[%c3_72, %c0_73, %c0_74] : memref<8x2x32xf32, #tpu.memory_space<vmem>>, vector<1x2x32xf32>
    %298 = vector.shape_cast %297 : vector<1x2x32xf32> to vector<2x32xf32>
    %299 = vector.shape_cast %296 : vector<2x32xf32> to vector<1x2x32xf32>
    tpu.vector_store %arg10[%c3_72, %c0_73, %c0_74], %299 {strides = array<i32>} : memref<8x2x32xf32, #tpu.memory_space<vmem>>, vector<1x2x32xf32>,
    %300 = vector.extract_strided_slice %205 {offsets = [4, 0, 0], sizes = [1, 2, 128], strides = [1, 1, 1]} : vector<8x2x128xf32> to vector<1x2x128xf32>
    %301 = vector.shape_cast %300 : vector<1x2x128xf32> to vector<2x128xf32>
    %302 = arith.truncf %296 : vector<2x32xf32> to vector<2x32xbf16>
    %cst_75 = arith.constant dense<0.000000e+00> : vector<2x128xf32>
    %303 = tpu.matmul %302, %197, %cst_75 {dimension_numbers = #tpu.dot_dimension_numbers<[1], [0], [0], [1], [0, 0, 1, 1], [], []>} : vector<2x32xbf16>, vector<32x128xbf16>, vector<2x128xf32> -> vector<2x128xf32>
    %304 = arith.addf %301, %303 : vector<2x128xf32>
    %305 = arith.negf %304 : vector<2x128xf32>
    %306 = math.exp %305 : vector<2x128xf32>
    %cst_76 = arith.constant 1.000000e+00 : f32
    %307 = vector.broadcast %cst_76 : f32 to vector<2x128xf32>
    %308 = arith.addf %307, %306 : vector<2x128xf32>
    %309 = arith.divf %307, %308 : vector<2x128xf32>
    %310 = math.tanh %304 : vector<2x128xf32>
    %311 = vector.extract_strided_slice %309 {offsets = [0, 0], sizes = [2, 32], strides = [1, 1]} : vector<2x128xf32> to vector<2x32xf32>
    %312 = vector.extract_strided_slice %309 {offsets = [0, 32], sizes = [2, 32], strides = [1, 1]} : vector<2x128xf32> to vector<2x32xf32>
    %313 = vector.extract_strided_slice %310 {offsets = [0, 64], sizes = [2, 32], strides = [1, 1]} : vector<2x128xf32> to vector<2x32xf32>
    %314 = vector.extract_strided_slice %309 {offsets = [0, 96], sizes = [2, 32], strides = [1, 1]} : vector<2x128xf32> to vector<2x32xf32>
    %315 = arith.mulf %312, %294 : vector<2x32xf32>
    %316 = arith.mulf %311, %313 : vector<2x32xf32>
    %317 = arith.addf %315, %316 : vector<2x32xf32>
    %318 = math.tanh %317 : vector<2x32xf32>
    %319 = arith.mulf %314, %318 : vector<2x32xf32>
    %c4_77 = arith.constant 4 : index
    %c0_78 = arith.constant 0 : index
    %c0_79 = arith.constant 0 : index
    %320 = vector.load %arg10[%c4_77, %c0_78, %c0_79] : memref<8x2x32xf32, #tpu.memory_space<vmem>>, vector<1x2x32xf32>
    %321 = vector.shape_cast %320 : vector<1x2x32xf32> to vector<2x32xf32>
    %322 = vector.shape_cast %319 : vector<2x32xf32> to vector<1x2x32xf32>
    tpu.vector_store %arg10[%c4_77, %c0_78, %c0_79], %322 {strides = array<i32>} : memref<8x2x32xf32, #tpu.memory_space<vmem>>, vector<1x2x32xf32>,
    %323 = vector.extract_strided_slice %205 {offsets = [5, 0, 0], sizes = [1, 2, 128], strides = [1, 1, 1]} : vector<8x2x128xf32> to vector<1x2x128xf32>
    %324 = vector.shape_cast %323 : vector<1x2x128xf32> to vector<2x128xf32>
    %325 = arith.truncf %319 : vector<2x32xf32> to vector<2x32xbf16>
    %cst_80 = arith.constant dense<0.000000e+00> : vector<2x128xf32>
    %326 = tpu.matmul %325, %197, %cst_80 {dimension_numbers = #tpu.dot_dimension_numbers<[1], [0], [0], [1], [0, 0, 1, 1], [], []>} : vector<2x32xbf16>, vector<32x128xbf16>, vector<2x128xf32> -> vector<2x128xf32>
    %327 = arith.addf %324, %326 : vector<2x128xf32>
    %328 = arith.negf %327 : vector<2x128xf32>
    %329 = math.exp %328 : vector<2x128xf32>
    %cst_81 = arith.constant 1.000000e+00 : f32
    %330 = vector.broadcast %cst_81 : f32 to vector<2x128xf32>
    %331 = arith.addf %330, %329 : vector<2x128xf32>
    %332 = arith.divf %330, %331 : vector<2x128xf32>
    %333 = math.tanh %327 : vector<2x128xf32>
    %334 = vector.extract_strided_slice %332 {offsets = [0, 0], sizes = [2, 32], strides = [1, 1]} : vector<2x128xf32> to vector<2x32xf32>
    %335 = vector.extract_strided_slice %332 {offsets = [0, 32], sizes = [2, 32], strides = [1, 1]} : vector<2x128xf32> to vector<2x32xf32>
    %336 = vector.extract_strided_slice %333 {offsets = [0, 64], sizes = [2, 32], strides = [1, 1]} : vector<2x128xf32> to vector<2x32xf32>
    %337 = vector.extract_strided_slice %332 {offsets = [0, 96], sizes = [2, 32], strides = [1, 1]} : vector<2x128xf32> to vector<2x32xf32>
    %338 = arith.mulf %335, %317 : vector<2x32xf32>
    %339 = arith.mulf %334, %336 : vector<2x32xf32>
    %340 = arith.addf %338, %339 : vector<2x32xf32>
    %341 = math.tanh %340 : vector<2x32xf32>
    %342 = arith.mulf %337, %341 : vector<2x32xf32>
    %c5_82 = arith.constant 5 : index
    %c0_83 = arith.constant 0 : index
    %c0_84 = arith.constant 0 : index
    %343 = vector.load %arg10[%c5_82, %c0_83, %c0_84] : memref<8x2x32xf32, #tpu.memory_space<vmem>>, vector<1x2x32xf32>
    %344 = vector.shape_cast %343 : vector<1x2x32xf32> to vector<2x32xf32>
    %345 = vector.shape_cast %342 : vector<2x32xf32> to vector<1x2x32xf32>
    tpu.vector_store %arg10[%c5_82, %c0_83, %c0_84], %345 {strides = array<i32>} : memref<8x2x32xf32, #tpu.memory_space<vmem>>, vector<1x2x32xf32>,
    %346 = vector.extract_strided_slice %205 {offsets = [6, 0, 0], sizes = [1, 2, 128], strides = [1, 1, 1]} : vector<8x2x128xf32> to vector<1x2x128xf32>
    %347 = vector.shape_cast %346 : vector<1x2x128xf32> to vector<2x128xf32>
    %348 = arith.truncf %342 : vector<2x32xf32> to vector<2x32xbf16>
    %cst_85 = arith.constant dense<0.000000e+00> : vector<2x128xf32>
    %349 = tpu.matmul %348, %197, %cst_85 {dimension_numbers = #tpu.dot_dimension_numbers<[1], [0], [0], [1], [0, 0, 1, 1], [], []>} : vector<2x32xbf16>, vector<32x128xbf16>, vector<2x128xf32> -> vector<2x128xf32>
    %350 = arith.addf %347, %349 : vector<2x128xf32>
    %351 = arith.negf %350 : vector<2x128xf32>
    %352 = math.exp %351 : vector<2x128xf32>
    %cst_86 = arith.constant 1.000000e+00 : f32
    %353 = vector.broadcast %cst_86 : f32 to vector<2x128xf32>
    %354 = arith.addf %353, %352 : vector<2x128xf32>
    %355 = arith.divf %353, %354 : vector<2x128xf32>
    %356 = math.tanh %350 : vector<2x128xf32>
    %357 = vector.extract_strided_slice %355 {offsets = [0, 0], sizes = [2, 32], strides = [1, 1]} : vector<2x128xf32> to vector<2x32xf32>
    %358 = vector.extract_strided_slice %355 {offsets = [0, 32], sizes = [2, 32], strides = [1, 1]} : vector<2x128xf32> to vector<2x32xf32>
    %359 = vector.extract_strided_slice %356 {offsets = [0, 64], sizes = [2, 32], strides = [1, 1]} : vector<2x128xf32> to vector<2x32xf32>
    %360 = vector.extract_strided_slice %355 {offsets = [0, 96], sizes = [2, 32], strides = [1, 1]} : vector<2x128xf32> to vector<2x32xf32>
    %361 = arith.mulf %358, %340 : vector<2x32xf32>
    %362 = arith.mulf %357, %359 : vector<2x32xf32>
    %363 = arith.addf %361, %362 : vector<2x32xf32>
    %364 = math.tanh %363 : vector<2x32xf32>
    %365 = arith.mulf %360, %364 : vector<2x32xf32>
    %c6_87 = arith.constant 6 : index
    %c0_88 = arith.constant 0 : index
    %c0_89 = arith.constant 0 : index
    %366 = vector.load %arg10[%c6_87, %c0_88, %c0_89] : memref<8x2x32xf32, #tpu.memory_space<vmem>>, vector<1x2x32xf32>
    %367 = vector.shape_cast %366 : vector<1x2x32xf32> to vector<2x32xf32>
    %368 = vector.shape_cast %365 : vector<2x32xf32> to vector<1x2x32xf32>
    tpu.vector_store %arg10[%c6_87, %c0_88, %c0_89], %368 {strides = array<i32>} : memref<8x2x32xf32, #tpu.memory_space<vmem>>, vector<1x2x32xf32>,
    %369 = vector.extract_strided_slice %205 {offsets = [7, 0, 0], sizes = [1, 2, 128], strides = [1, 1, 1]} : vector<8x2x128xf32> to vector<1x2x128xf32>
    %370 = vector.shape_cast %369 : vector<1x2x128xf32> to vector<2x128xf32>
    %371 = arith.truncf %365 : vector<2x32xf32> to vector<2x32xbf16>
    %cst_90 = arith.constant dense<0.000000e+00> : vector<2x128xf32>
    %372 = tpu.matmul %371, %197, %cst_90 {dimension_numbers = #tpu.dot_dimension_numbers<[1], [0], [0], [1], [0, 0, 1, 1], [], []>} : vector<2x32xbf16>, vector<32x128xbf16>, vector<2x128xf32> -> vector<2x128xf32>
    %373 = arith.addf %370, %372 : vector<2x128xf32>
    %374 = arith.negf %373 : vector<2x128xf32>
    %375 = math.exp %374 : vector<2x128xf32>
    %cst_91 = arith.constant 1.000000e+00 : f32
    %376 = vector.broadcast %cst_91 : f32 to vector<2x128xf32>
    %377 = arith.addf %376, %375 : vector<2x128xf32>
    %378 = arith.divf %376, %377 : vector<2x128xf32>
    %379 = math.tanh %373 : vector<2x128xf32>
    %380 = vector.extract_strided_slice %378 {offsets = [0, 0], sizes = [2, 32], strides = [1, 1]} : vector<2x128xf32> to vector<2x32xf32>
    %381 = vector.extract_strided_slice %378 {offsets = [0, 32], sizes = [2, 32], strides = [1, 1]} : vector<2x128xf32> to vector<2x32xf32>
    %382 = vector.extract_strided_slice %379 {offsets = [0, 64], sizes = [2, 32], strides = [1, 1]} : vector<2x128xf32> to vector<2x32xf32>
    %383 = vector.extract_strided_slice %378 {offsets = [0, 96], sizes = [2, 32], strides = [1, 1]} : vector<2x128xf32> to vector<2x32xf32>
    %384 = arith.mulf %381, %363 : vector<2x32xf32>
    %385 = arith.mulf %380, %382 : vector<2x32xf32>
    %386 = arith.addf %384, %385 : vector<2x32xf32>
    %387 = math.tanh %386 : vector<2x32xf32>
    %388 = arith.mulf %383, %387 : vector<2x32xf32>
    %c7_92 = arith.constant 7 : index
    %c0_93 = arith.constant 0 : index
    %c0_94 = arith.constant 0 : index
    %389 = vector.load %arg10[%c7_92, %c0_93, %c0_94] : memref<8x2x32xf32, #tpu.memory_space<vmem>>, vector<1x2x32xf32>
    %390 = vector.shape_cast %389 : vector<1x2x32xf32> to vector<2x32xf32>
    %391 = vector.shape_cast %388 : vector<2x32xf32> to vector<1x2x32xf32>
    tpu.vector_store %arg10[%c7_92, %c0_93, %c0_94], %391 {strides = array<i32>} : memref<8x2x32xf32, #tpu.memory_space<vmem>>, vector<1x2x32xf32>,
    %c0_95 = arith.constant 0 : index
    %c0_96 = arith.constant 0 : index
    %c0_97 = arith.constant 0 : index
    %392 = vector.load %arg10[%c0_95, %c0_96, %c0_97] : memref<8x2x32xf32, #tpu.memory_space<vmem>>, vector<8x2x32xf32>
    %393 = arith.truncf %392 : vector<8x2x32xf32> to vector<8x2x32xbf16>
    %394 = vector.shape_cast %393 : vector<8x2x32xbf16> to vector<16x32xbf16>
    %c0_98 = arith.constant 0 : index
    %c0_99 = arith.constant 0 : index
    %395 = vector.load %arg7[%c0_98, %c0_99] : memref<32x8xbf16, #tpu.memory_space<vmem>>, vector<32x8xbf16>
    %cst_100 = arith.constant dense<0.000000e+00> : vector<16x8xf32>
    %396 = tpu.matmul %394, %395, %cst_100 {dimension_numbers = #tpu.dot_dimension_numbers<[1], [0], [0], [1], [0, 0, 1, 1], [], []>} : vector<16x32xbf16>, vector<32x8xbf16>, vector<16x8xf32> -> vector<16x8xf32>
    %c0_101 = arith.constant 0 : index
    %c0_102 = arith.constant 0 : index
    %397 = vector.load %arg8[%c0_101, %c0_102] : memref<1x8xf32, #tpu.memory_space<vmem>>, vector<1x8xf32>
    %398 = vector.broadcast %397 : vector<1x8xf32> to vector<16x8xf32>
    %399 = arith.addf %396, %398 : vector<16x8xf32>
    %400 = vector.shape_cast %399 : vector<16x8xf32> to vector<8x2x8xf32>
    %c0_103 = arith.constant 0 : index
    %c0_104 = arith.constant 0 : index
    %c0_105 = arith.constant 0 : index
    %401 = vector.load %arg9[%c0_103, %c0_104, %c0_105] : memref<8x2x8xf32, #tpu.memory_space<vmem>>, vector<8x2x8xf32>
    tpu.vector_store %arg9[%c0_103, %c0_104, %c0_105], %400 {strides = array<i32>} : memref<8x2x8xf32, #tpu.memory_space<vmem>>, vector<8x2x8xf32>,
    return
  }
}

</mosaic_0001>

<llo_original>
// kernel: model_forward.1
$region0: #{model_forward.1}
  #allocation0 [shape = 'u32[]', space=smem, size = 0x4, offset = 0x4, fixed_abs, tag = 'smem constant byte address 0x4 - core index']
  #allocation1 [shape = 'u32[144,128]{1,0:T(1,128)}', space=vmem, size = 0x12000, scoped, tag = 'internal scratch']
  #allocation2 [shape = 'f32[8,2,32]{2,1,0:T(2,128)}', space=vmem, size = 0x2000, scoped, tag = 'scratch operand']
  %s0 = inlined_call_operand.vmem [shape: f32[8,2,4], index: 0, kind: input, shape index: {}]
  %s1 = inlined_call_operand.vmem [shape: bf16[4,128], index: 1, kind: input, shape index: {}]
  %s2 = inlined_call_operand.vmem [shape: bf16[32,128], index: 2, kind: input, shape index: {}]
  %s3 = inlined_call_operand.vmem [shape: f32[1,128], index: 3, kind: input, shape index: {}]
  %s4 = inlined_call_operand.vmem [shape: bf16[32,128], index: 4, kind: input, shape index: {}]
  %s5 = inlined_call_operand.vmem [shape: bf16[32,128], index: 5, kind: input, shape index: {}]
  %s6 = inlined_call_operand.vmem [shape: f32[1,128], index: 6, kind: input, shape index: {}]
  %s7 = inlined_call_operand.vmem [shape: bf16[32,8], index: 7, kind: input, shape index: {}]
  %s8 = inlined_call_operand.hbm [shape: f32[1,8], index: 8, kind: input, shape index: {}]
  %s9 = inlined_call_operand.vmem [shape: f32[8,2,8], index: 9, kind: output, shape index: {}]
  %s10 = sld [smem:[#allocation0]]
  $region50: #{model_forward.1} parent=0
    _
  %s12 = ssub.s32 1, %s10
  %s13 = scalar_select 0, %s12, %s10
  $region1: #{model_forward.1} parent=0
    #allocation3 [shape = 'u8[512]{0}', space=vmem, size = 0x400, scoped, tag = 'input window, operand 8, single buffered']
    #allocation4 [shape = 's32[1]{0}', space=sflag, size = 0x4, scoped, tag = 'scoped memory for model_forward.1']
    %14 = vsyncpa [#allocation4], 0
    // Predicated region
    $region2: #{model_forward.1} parent=1 // pred_check
      _
    $region3: #{model_forward.1} parent=1 // pred_check_branch
      %16 = sbr.rel (0) target = $region5
    $region4: #{model_forward.1} parent=1 // pred_region
      _
    $region5: #{model_forward.1} parent=1 // pred_fallthru
      _
    // Predicated region
    $region6: #{model_forward.1} parent=1 // pred_check
      _
    $region7: #{model_forward.1} parent=1 // pred_check_branch
      %18 = sbr.rel (0) target = $region9
    $region8: #{model_forward.1} parent=1 // pred_region
      _
    $region9: #{model_forward.1} parent=1 // pred_fallthru
      _
    // Predicated region
    $region10: #{model_forward.1} parent=1 // pred_check
      _
    $region11: #{model_forward.1} parent=1 // pred_check_branch
      %20 = sbr.rel (0) target = $region13
    $region12: #{model_forward.1} parent=1 // pred_region
      _
    $region13: #{model_forward.1} parent=1 // pred_fallthru
      _
    // Predicated region
    $region14: #{model_forward.1} parent=1 // pred_check
      _
    $region15: #{model_forward.1} parent=1 // pred_check_branch
      %22 = sbr.rel (0) target = $region17
    $region16: #{model_forward.1} parent=1 // pred_region
      _
    $region17: #{model_forward.1} parent=1 // pred_fallthru
      _
    // Predicated region
    $region18: #{model_forward.1} parent=1 // pred_check
      _
    $region19: #{model_forward.1} parent=1 // pred_check_branch
      %24 = sbr.rel (0) target = $region21
    $region20: #{model_forward.1} parent=1 // pred_region
      _
    $region21: #{model_forward.1} parent=1 // pred_fallthru
      _
    // Predicated region
    $region22: #{model_forward.1} parent=1 // pred_check
      _
    $region23: #{model_forward.1} parent=1 // pred_check_branch
      %26 = sbr.rel (0) target = $region25
    $region24: #{model_forward.1} parent=1 // pred_region
      _
    $region25: #{model_forward.1} parent=1 // pred_fallthru
      _
    // Predicated region
    $region26: #{model_forward.1} parent=1 // pred_check
      _
    $region27: #{model_forward.1} parent=1 // pred_check_branch
      %28 = sbr.rel (0) target = $region29
    $region28: #{model_forward.1} parent=1 // pred_region
      _
    $region29: #{model_forward.1} parent=1 // pred_fallthru
      _
    // Predicated region
    $region30: #{model_forward.1} parent=1 // pred_check
      _
    $region31: #{model_forward.1} parent=1 // pred_check_branch
      %30 = sbr.rel (0) target = $region33
    $region32: #{model_forward.1} parent=1 // pred_region
      _
    $region33: #{model_forward.1} parent=1 // pred_fallthru
      _
    // Predicated region
    $region34: #{model_forward.1} parent=1 // pred_check
      _
    $region35: #{model_forward.1} parent=1 // pred_check_branch
      %32 = sbr.rel (0) target = $region37
    $region36: #{model_forward.1} parent=1 // pred_region
      %s34 = ssub.s32 16, 16
      %35 = vsyncadd [#allocation4], %s34
      %s37 = sshll.u32 [#allocation3], 4
      %s38 = int_to_ptr.vmem [resolvable:$true] %s37
      %40 = dma.hbm_to_vmem [thread:$0]  %s8, 16, %s38, [#allocation4]
    $region37: #{model_forward.1} parent=1 // pred_fallthru
      _
    // Predicated region
    $region38: #{model_forward.1} parent=1 // pred_check
      _
    $region39: #{model_forward.1} parent=1 // pred_check_branch
      %42 = sbr.rel (0) target = $region41
    $region40: #{model_forward.1} parent=1 // pred_region
      %43 = dma.done [#allocation4], 16
    $region41: #{model_forward.1} parent=1 // pred_fallthru
      _
    %v45 = vld [vmem:[%s1] sm:$0x3]
    %v46 = vld [vmem:[%s2] sm:$0xf]
    %v47 = vld [vmem:[%s2 + $0x4] sm:$0xf]
    %v48 = vld [vmem:[%s2 + $0x8] sm:$0xf]
    %v49 = vld [vmem:[%s2 + $0xc] sm:$0xf]
    %v50 = vld [vmem:[%s3] sm:$0x1]
    %v51 = vld [vmem:[%s0] sm:$0x3]
    %v52 = vld [vmem:[%s0 + $0x2] sm:$0x3]
    %v53 = vld [vmem:[%s0 + $0x4] sm:$0x3]
    %v54 = vld [vmem:[%s0 + $0x6] sm:$0x3]
    %v55 = vld [vmem:[%s0 + $0x8] sm:$0x3]
    %v56 = vld [vmem:[%s0 + $0xa] sm:$0x3]
    %v57 = vld [vmem:[%s0 + $0xc] sm:$0x3]
    %v58 = vld [vmem:[%s0 + $0xe] sm:$0x3]
    %v59 = vpack.c.bf16 %v51, %v51
    %v60 = vpack.c.bf16 %v52, %v52
    %v61 = vpack.c.bf16 %v53, %v53
    %v62 = vpack.c.bf16 %v54, %v54
    %v63 = vpack.c.bf16 %v55, %v55
    %v64 = vpack.c.bf16 %v56, %v56
    %v65 = vpack.c.bf16 %v57, %v57
    %v66 = vpack.c.bf16 %v58, %v58
    %v68 = vlaneseq
    %v69 = vshrl.u32 %v68, 7
    %v70 = vsub.s32 0, %v69
    %v71 = vrot.slane %v50, %v70
    %v81 = vcombine.low %v59, %v60
    %v82 = vcombine.low %v61, %v62
    %v83 = vcombine.low %v63, %v64
    %v84 = vcombine.low %v65, %v66
    %v86 = vunpack.c.l.s4 1966171168
    %v87 = vunpack.c.0.s8 %v86
    %v88 = vlaneseq
    %v89 = vshrl.u32 %v88, 7
    %v90 = vsub.s32 %v87, %v89
    %v91 = vrot.slane %v81, %v90
    %v93 = vunpack.c.l.s4 1966171168
    %v94 = vunpack.c.0.s8 %v93
    %v95 = vlaneseq
    %v96 = vshrl.u32 %v95, 7
    %v97 = vsub.s32 %v94, %v96
    %v98 = vrot.slane %v82, %v97
    %v100 = vunpack.c.l.s4 1966171168
    %v101 = vunpack.c.0.s8 %v100
    %v102 = vlaneseq
    %v103 = vshrl.u32 %v102, 7
    %v104 = vsub.s32 %v101, %v103
    %v105 = vrot.slane %v83, %v104
    %v107 = vunpack.c.l.s4 1966171168
    %v108 = vunpack.c.0.s8 %v107
    %v109 = vlaneseq
    %v110 = vshrl.u32 %v109, 7
    %v111 = vsub.s32 %v108, %v110
    %v112 = vrot.slane %v84, %v111
    %v113 = vcombine.low %v91, %v98
    %v114 = vcombine.low %v105, %v112
    %v116 = vunpack.c.l.s4 1966171168
    %v117 = vunpack.c.0.s8 %v116
    %v118 = vlaneseq
    %v119 = vshrl.u32 %v118, 7
    %v120 = vsub.s32 %v117, %v119
    %v121 = vrot.slane %v113, %v120
    %v123 = vunpack.c.l.s4 1966171168
    %v124 = vunpack.c.0.s8 %v123
    %v125 = vlaneseq
    %v126 = vshrl.u32 %v125, 7
    %v127 = vsub.s32 %v124, %v126
    %v128 = vrot.slane %v114, %v127
    %v129 = vcombine.low %v121, %v128
    %vm130 = vcmask 31744
    %v132 = vsel %vm130, %v129, 0
    %vm134 = vcmask 1041408
    %v136 = vsel %vm134, %v45, 0
    %138 = vmatprep.subr.bf16.mxu0 0
    %139 = vmatpush1.bf16.msra.mxu0 %v136
    %140 = vmatprep.subr.bf16.mxu0 0
    %141 = vmatpush1.bf16.msra.mxu0 0
    %142 = vmatprep.subr.bf16.mxu0 0
    %143 = vmatpush1.bf16.msra.mxu0 0
    %144 = vmatprep.subr.bf16.mxu0 0
    %145 = vmatpush1.bf16.msra.mxu0 0
    %146 = vmatprep.subr.bf16.mxu0 0
    %147 = vmatpush1.bf16.msra.mxu0 0
    %148 = vmatprep.subr.bf16.mxu0 0
    %149 = vmatpush1.bf16.msra.mxu0 0
    %150 = vmatprep.subr.bf16.mxu0 0
    %151 = vmatpush1.bf16.msra.mxu0 0
    %152 = vmatprep.subr.bf16.mxu0 0
    %153 = vmatpush1.bf16.msra.mxu0 0
    %154 = vmatprep.subr.bf16.mxu0 0
    %155 = vmatpush1.bf16.msra.mxu0 0
    %156 = vmatprep.subr.bf16.mxu0 0
    %157 = vmatpush1.bf16.msra.mxu0 0
    %158 = vmatprep.subr.bf16.mxu0 0
    %159 = vmatpush1.bf16.msra.mxu0 0
    %160 = vmatprep.subr.bf16.mxu0 0
    %161 = vmatpush1.bf16.msra.mxu0 0
    %162 = vmatprep.subr.bf16.mxu0 0
    %163 = vmatpush1.bf16.msra.mxu0 0
    %164 = vmatprep.subr.bf16.mxu0 0
    %165 = vmatpush1.bf16.msra.mxu0 0
    %166 = vmatprep.subr.bf16.mxu0 0
    %167 = vmatpush1.bf16.msra.mxu0 0
    %168 = vmatprep.subr.bf16.mxu0 0
    %169 = vmatpush1.bf16.msra.mxu0 0
    %170 = vmatprep.mubr.bf16.mxu0 0
    %171 = vmatmul.mubr.bf16.gmra.mrb[0].mxu0 %v132
    %v172 = vpop.f32.mrb[0].mxu0
    %v173 = vadd.f32 %v71, %v172
    %v174 = vpop.f32.mrb[0].mxu0
    %v175 = vpop.f32.mrb[0].mxu0
    %v176 = vadd.f32 %v71, %v175
    %v177 = vpop.f32.mrb[0].mxu0
    %178 = vdwg.mxu0
    %v181 = vcombine.high %v173, %v173
    %v183 = vunpack.c.l.s4 1983009808
    %v184 = vunpack.c.0.s8 %v183
    %v185 = vlaneseq
    %v186 = vshrl.u32 %v185, 7
    %v187 = vsub.s32 %v184, %v186
    %v188 = vrot.slane %v173, %v187
    %v190 = vunpack.c.l.s4 1983009808
    %v191 = vunpack.c.0.s8 %v190
    %v192 = vlaneseq
    %v193 = vshrl.u32 %v192, 7
    %v194 = vsub.s32 %v191, %v193
    %v195 = vrot.slane %v181, %v194
    %v196 = vcombine.high %v188, %v188
    %v197 = vcombine.high %v195, %v195
    %v198 = vcombine.high %v176, %v176
    %v200 = vunpack.c.l.s4 1983009808
    %v201 = vunpack.c.0.s8 %v200
    %v202 = vlaneseq
    %v203 = vshrl.u32 %v202, 7
    %v204 = vsub.s32 %v201, %v203
    %v205 = vrot.slane %v176, %v204
    %v207 = vunpack.c.l.s4 1983009808
    %v208 = vunpack.c.0.s8 %v207
    %v209 = vlaneseq
    %v210 = vshrl.u32 %v209, 7
    %v211 = vsub.s32 %v208, %v210
    %v212 = vrot.slane %v198, %v211
    %v213 = vcombine.high %v205, %v205
    %v214 = vcombine.high %v212, %v212
    %v227 = vunpack.c.l.b16 %v46
    %v228 = vunpack.c.l.b16 %v47
    %v229 = vunpack.c.l.b16 %v48
    %v230 = vunpack.c.l.b16 %v49
    %v231 = vpack.c.b16 %v228, %v227
    %v232 = vpack.c.b16 %v230, %v229
    %vm235 = vcmask 261120
    %v237 = vsel %vm235, 0, 0
    %239 = vmatprep.subr.bf16.mxu0 0
    %240 = vmatpush1.bf16.msra.mxu0 %v231
    %241 = vmatprep.subr.bf16.mxu0 0
    %242 = vmatpush1.bf16.msra.mxu0 %v232
    %243 = vmatprep.subr.bf16.mxu0 0
    %244 = vmatpush1.bf16.msra.mxu0 0
    %245 = vmatprep.subr.bf16.mxu0 0
    %246 = vmatpush1.bf16.msra.mxu0 0
    %247 = vmatprep.subr.bf16.mxu0 0
    %248 = vmatpush1.bf16.msra.mxu0 0
    %249 = vmatprep.subr.bf16.mxu0 0
    %250 = vmatpush1.bf16.msra.mxu0 0
    %251 = vmatprep.subr.bf16.mxu0 0
    %252 = vmatpush1.bf16.msra.mxu0 0
    %253 = vmatprep.subr.bf16.mxu0 0
    %254 = vmatpush1.bf16.msra.mxu0 0
    %255 = vmatprep.subr.bf16.mxu0 0
    %256 = vmatpush1.bf16.msra.mxu0 0
    %257 = vmatprep.subr.bf16.mxu0 0
    %258 = vmatpush1.bf16.msra.mxu0 0
    %259 = vmatprep.subr.bf16.mxu0 0
    %260 = vmatpush1.bf16.msra.mxu0 0
    %261 = vmatprep.subr.bf16.mxu0 0
    %262 = vmatpush1.bf16.msra.mxu0 0
    %263 = vmatprep.subr.bf16.mxu0 0
    %264 = vmatpush1.bf16.msra.mxu0 0
    %265 = vmatprep.subr.bf16.mxu0 0
    %266 = vmatpush1.bf16.msra.mxu0 0
    %267 = vmatprep.subr.bf16.mxu0 0
    %268 = vmatpush1.bf16.msra.mxu0 0
    %269 = vmatprep.subr.bf16.mxu0 0
    %270 = vmatpush1.bf16.msra.mxu0 0
    %271 = vmatprep.mubr.bf16.mxu0 0
    %272 = vmatmul.mubr.bf16.gmra.mrb[0].mxu0 %v237
    %v273 = vpop.f32.mrb[0].mxu0
    %v274 = vadd.f32 0.0, %v273
    %v275 = vpop.f32.mrb[0].mxu0
    %v276 = vpop.f32.mrb[0].mxu0
    %v277 = vpop.f32.mrb[0].mxu0
    %278 = vdwg.mxu0
    %v279 = vadd.f32 %v188, %v274
    %v280 = vxor.u32 %v279, 2147483648
    %v281 = vmul.f32 %v280, 1.442695
    %v282 = vpow.pop %v281
    %v283 = vadd.f32 %v282, 1.0
    %v284 = vrcp.pop %v283
    %v285 = vmul.f32 1.0, %v284
    %v286 = vtanh.pop %v279
    %v287 = vmul.f32 %v285, 0.0
    %289 = vrot.lane.b32.xlu0 %v286, 64
    %v290 = vpop.permute.xlu0 %289
    %v292 = vmul.f32 %v285, %v290
    %294 = vrot.lane.b32.xlu0 %v292, 32
    %v295 = vpop.permute.xlu0 %294
    %v297 = vadd.f32 %v287, %v295
    %v298 = vtanh.pop %v297
    %300 = vrot.lane.b32.xlu0 %v298, 64
    %v301 = vpop.permute.xlu0 %300
    %v303 = vmul.f32 %v285, %v301
    %v306 = vunpack.c.l.s4 1983009808
    %v307 = vunpack.c.0.s8 %v306
    %v308 = vlaneseq
    %v309 = vshrl.u32 %v308, 7
    %v310 = vsub.s32 %v307, %v309
    %v311 = vrot.slane %v303, %v310
    %312 = vrot.lane.b32.xlu0 %v311, 32
    %v313 = vpop.permute.xlu0 %312
    %vm315 = vcmask 254976
    %316 = vst.msk [vmem:[#allocation2] sm:$0x3] %vm315, %v313
    %v317 = vpack.c.bf16 %v303, %v303
    %319 = vrot.lane.b32.xlu0 %v317, 32
    %v320 = vpop.permute.xlu0 %319
    %v322 = vsel %vm235, %v320, 0
    %324 = vmatprep.subr.bf16.mxu0 0
    %325 = vmatpush1.bf16.msra.mxu0 %v231
    %326 = vmatprep.subr.bf16.mxu0 0
    %327 = vmatpush1.bf16.msra.mxu0 %v232
    %328 = vmatprep.subr.bf16.mxu0 0
    %329 = vmatpush1.bf16.msra.mxu0 0
    %330 = vmatprep.subr.bf16.mxu0 0
    %331 = vmatpush1.bf16.msra.mxu0 0
    %332 = vmatprep.subr.bf16.mxu0 0
    %333 = vmatpush1.bf16.msra.mxu0 0
    %334 = vmatprep.subr.bf16.mxu0 0
    %335 = vmatpush1.bf16.msra.mxu0 0
    %336 = vmatprep.subr.bf16.mxu0 0
    %337 = vmatpush1.bf16.msra.mxu0 0
    %338 = vmatprep.subr.bf16.mxu0 0
    %339 = vmatpush1.bf16.msra.mxu0 0
    %340 = vmatprep.subr.bf16.mxu0 0
    %341 = vmatpush1.bf16.msra.mxu0 0
    %342 = vmatprep.subr.bf16.mxu0 0
    %343 = vmatpush1.bf16.msra.mxu0 0
    %344 = vmatprep.subr.bf16.mxu0 0
    %345 = vmatpush1.bf16.msra.mxu0 0
    %346 = vmatprep.subr.bf16.mxu0 0
    %347 = vmatpush1.bf16.msra.mxu0 0
    %348 = vmatprep.subr.bf16.mxu0 0
    %349 = vmatpush1.bf16.msra.mxu0 0
    %350 = vmatprep.subr.bf16.mxu0 0
    %351 = vmatpush1.bf16.msra.mxu0 0
    %352 = vmatprep.subr.bf16.mxu0 0
    %353 = vmatpush1.bf16.msra.mxu0 0
    %354 = vmatprep.subr.bf16.mxu0 0
    %355 = vmatpush1.bf16.msra.mxu0 0
    %356 = vmatprep.mubr.bf16.mxu0 0
    %357 = vmatmul.mubr.bf16.gmra.mrb[0].mxu0 %v322
    %v358 = vpop.f32.mrb[0].mxu0
    %v359 = vadd.f32 0.0, %v358
    %v360 = vpop.f32.mrb[0].mxu0
    %v361 = vpop.f32.mrb[0].mxu0
    %v362 = vpop.f32.mrb[0].mxu0
    %363 = vdwg.mxu0
    %v364 = vadd.f32 %v196, %v359
    %v365 = vxor.u32 %v364, 2147483648
    %v366 = vmul.f32 %v365, 1.442695
    %v367 = vpow.pop %v366
    %v368 = vadd.f32 %v367, 1.0
    %v369 = vrcp.pop %v368
    %v370 = vmul.f32 1.0, %v369
    %v371 = vtanh.pop %v364
    %v372 = vmul.f32 %v370, %v297
    %374 = vrot.lane.b32.xlu0 %v371, 64
    %v375 = vpop.permute.xlu0 %374
    %v377 = vmul.f32 %v370, %v375
    %379 = vrot.lane.b32.xlu0 %v377, 32
    %v380 = vpop.permute.xlu0 %379
    %v382 = vadd.f32 %v372, %v380
    %v383 = vtanh.pop %v382
    %385 = vrot.lane.b32.xlu0 %v383, 64
    %v386 = vpop.permute.xlu0 %385
    %v388 = vmul.f32 %v370, %v386
    %v391 = vunpack.c.l.s4 1983009808
    %v392 = vunpack.c.0.s8 %v391
    %v393 = vlaneseq
    %v394 = vshrl.u32 %v393, 7
    %v395 = vsub.s32 %v392, %v394
    %v396 = vrot.slane %v388, %v395
    %397 = vrot.lane.b32.xlu0 %v396, 32
    %v398 = vpop.permute.xlu0 %397
    %s400 = scalar_lea.vmem [#allocation2], 2
    %401 = vst.msk [vmem:[%s400] sm:$0x3] %vm315, %v398
    %v402 = vpack.c.bf16 %v388, %v388
    %404 = vrot.lane.b32.xlu0 %v402, 32
    %v405 = vpop.permute.xlu0 %404
    %v407 = vsel %vm235, %v405, 0
    %409 = vmatprep.subr.bf16.mxu0 0
    %410 = vmatpush1.bf16.msra.mxu0 %v231
    %411 = vmatprep.subr.bf16.mxu0 0
    %412 = vmatpush1.bf16.msra.mxu0 %v232
    %413 = vmatprep.subr.bf16.mxu0 0
    %414 = vmatpush1.bf16.msra.mxu0 0
    %415 = vmatprep.subr.bf16.mxu0 0
    %416 = vmatpush1.bf16.msra.mxu0 0
    %417 = vmatprep.subr.bf16.mxu0 0
    %418 = vmatpush1.bf16.msra.mxu0 0
    %419 = vmatprep.subr.bf16.mxu0 0
    %420 = vmatpush1.bf16.msra.mxu0 0
    %421 = vmatprep.subr.bf16.mxu0 0
    %422 = vmatpush1.bf16.msra.mxu0 0
    %423 = vmatprep.subr.bf16.mxu0 0
    %424 = vmatpush1.bf16.msra.mxu0 0
    %425 = vmatprep.subr.bf16.mxu0 0
    %426 = vmatpush1.bf16.msra.mxu0 0
    %427 = vmatprep.subr.bf16.mxu0 0
    %428 = vmatpush1.bf16.msra.mxu0 0
    %429 = vmatprep.subr.bf16.mxu0 0
    %430 = vmatpush1.bf16.msra.mxu0 0
    %431 = vmatprep.subr.bf16.mxu0 0
    %432 = vmatpush1.bf16.msra.mxu0 0
    %433 = vmatprep.subr.bf16.mxu0 0
    %434 = vmatpush1.bf16.msra.mxu0 0
    %435 = vmatprep.subr.bf16.mxu0 0
    %436 = vmatpush1.bf16.msra.mxu0 0
    %437 = vmatprep.subr.bf16.mxu0 0
    %438 = vmatpush1.bf16.msra.mxu0 0
    %439 = vmatprep.subr.bf16.mxu0 0
    %440 = vmatpush1.bf16.msra.mxu0 0
    %441 = vmatprep.mubr.bf16.mxu0 0
    %442 = vmatmul.mubr.bf16.gmra.mrb[0].mxu0 %v407
    %v443 = vpop.f32.mrb[0].mxu0
    %v444 = vadd.f32 0.0, %v443
    %v445 = vpop.f32.mrb[0].mxu0
    %v446 = vpop.f32.mrb[0].mxu0
    %v447 = vpop.f32.mrb[0].mxu0
    %448 = vdwg.mxu0
    %v449 = vadd.f32 %v195, %v444
    %v450 = vxor.u32 %v449, 2147483648
    %v451 = vmul.f32 %v450, 1.442695
    %v452 = vpow.pop %v451
    %v453 = vadd.f32 %v452, 1.0
    %v454 = vrcp.pop %v453
    %v455 = vmul.f32 1.0, %v454
    %v456 = vtanh.pop %v449
    %v457 = vmul.f32 %v455, %v382
    %459 = vrot.lane.b32.xlu0 %v456, 64
    %v460 = vpop.permute.xlu0 %459
    %v462 = vmul.f32 %v455, %v460
    %464 = vrot.lane.b32.xlu0 %v462, 32
    %v465 = vpop.permute.xlu0 %464
    %v467 = vadd.f32 %v457, %v465
    %v468 = vtanh.pop %v467
    %470 = vrot.lane.b32.xlu0 %v468, 64
    %v471 = vpop.permute.xlu0 %470
    %v473 = vmul.f32 %v455, %v471
    %v476 = vunpack.c.l.s4 1983009808
    %v477 = vunpack.c.0.s8 %v476
    %v478 = vlaneseq
    %v479 = vshrl.u32 %v478, 7
    %v480 = vsub.s32 %v477, %v479
    %v481 = vrot.slane %v473, %v480
    %482 = vrot.lane.b32.xlu0 %v481, 32
    %v483 = vpop.permute.xlu0 %482
    %s485 = scalar_lea.vmem [#allocation2], 4
    %486 = vst.msk [vmem:[%s485] sm:$0x3] %vm315, %v483
    %v487 = vpack.c.bf16 %v473, %v473
    %489 = vrot.lane.b32.xlu0 %v487, 32
    %v490 = vpop.permute.xlu0 %489
    %v492 = vsel %vm235, %v490, 0
    %494 = vmatprep.subr.bf16.mxu0 0
    %495 = vmatpush1.bf16.msra.mxu0 %v231
    %496 = vmatprep.subr.bf16.mxu0 0
    %497 = vmatpush1.bf16.msra.mxu0 %v232
    %498 = vmatprep.subr.bf16.mxu0 0
    %499 = vmatpush1.bf16.msra.mxu0 0
    %500 = vmatprep.subr.bf16.mxu0 0
    %501 = vmatpush1.bf16.msra.mxu0 0
    %502 = vmatprep.subr.bf16.mxu0 0
    %503 = vmatpush1.bf16.msra.mxu0 0
    %504 = vmatprep.subr.bf16.mxu0 0
    %505 = vmatpush1.bf16.msra.mxu0 0
    %506 = vmatprep.subr.bf16.mxu0 0
    %507 = vmatpush1.bf16.msra.mxu0 0
    %508 = vmatprep.subr.bf16.mxu0 0
    %509 = vmatpush1.bf16.msra.mxu0 0
    %510 = vmatprep.subr.bf16.mxu0 0
    %511 = vmatpush1.bf16.msra.mxu0 0
    %512 = vmatprep.subr.bf16.mxu0 0
    %513 = vmatpush1.bf16.msra.mxu0 0
    %514 = vmatprep.subr.bf16.mxu0 0
    %515 = vmatpush1.bf16.msra.mxu0 0
    %516 = vmatprep.subr.bf16.mxu0 0
    %517 = vmatpush1.bf16.msra.mxu0 0
    %518 = vmatprep.subr.bf16.mxu0 0
    %519 = vmatpush1.bf16.msra.mxu0 0
    %520 = vmatprep.subr.bf16.mxu0 0
    %521 = vmatpush1.bf16.msra.mxu0 0
    %522 = vmatprep.subr.bf16.mxu0 0
    %523 = vmatpush1.bf16.msra.mxu0 0
    %524 = vmatprep.subr.bf16.mxu0 0
    %525 = vmatpush1.bf16.msra.mxu0 0
    %526 = vmatprep.mubr.bf16.mxu0 0
    %527 = vmatmul.mubr.bf16.gmra.mrb[0].mxu0 %v492
    %v528 = vpop.f32.mrb[0].mxu0
    %v529 = vadd.f32 0.0, %v528
    %v530 = vpop.f32.mrb[0].mxu0
    %v531 = vpop.f32.mrb[0].mxu0
    %v532 = vpop.f32.mrb[0].mxu0
    %533 = vdwg.mxu0
    %v534 = vadd.f32 %v197, %v529
    %v535 = vxor.u32 %v534, 2147483648
    %v536 = vmul.f32 %v535, 1.442695
    %v537 = vpow.pop %v536
    %v538 = vadd.f32 %v537, 1.0
    %v539 = vrcp.pop %v538
    %v540 = vmul.f32 1.0, %v539
    %v541 = vtanh.pop %v534
    %v542 = vmul.f32 %v540, %v467
    %544 = vrot.lane.b32.xlu0 %v541, 64
    %v545 = vpop.permute.xlu0 %544
    %v547 = vmul.f32 %v540, %v545
    %549 = vrot.lane.b32.xlu0 %v547, 32
    %v550 = vpop.permute.xlu0 %549
    %v552 = vadd.f32 %v542, %v550
    %v553 = vtanh.pop %v552
    %555 = vrot.lane.b32.xlu0 %v553, 64
    %v556 = vpop.permute.xlu0 %555
    %v558 = vmul.f32 %v540, %v556
    %v561 = vunpack.c.l.s4 1983009808
    %v562 = vunpack.c.0.s8 %v561
    %v563 = vlaneseq
    %v564 = vshrl.u32 %v563, 7
    %v565 = vsub.s32 %v562, %v564
    %v566 = vrot.slane %v558, %v565
    %567 = vrot.lane.b32.xlu0 %v566, 32
    %v568 = vpop.permute.xlu0 %567
    %s570 = scalar_lea.vmem [#allocation2], 6
    %571 = vst.msk [vmem:[%s570] sm:$0x3] %vm315, %v568
    %v572 = vpack.c.bf16 %v558, %v558
    %574 = vrot.lane.b32.xlu0 %v572, 32
    %v575 = vpop.permute.xlu0 %574
    %v577 = vsel %vm235, %v575, 0
    %579 = vmatprep.subr.bf16.mxu0 0
    %580 = vmatpush1.bf16.msra.mxu0 %v231
    %581 = vmatprep.subr.bf16.mxu0 0
    %582 = vmatpush1.bf16.msra.mxu0 %v232
    %583 = vmatprep.subr.bf16.mxu0 0
    %584 = vmatpush1.bf16.msra.mxu0 0
    %585 = vmatprep.subr.bf16.mxu0 0
    %586 = vmatpush1.bf16.msra.mxu0 0
    %587 = vmatprep.subr.bf16.mxu0 0
    %588 = vmatpush1.bf16.msra.mxu0 0
    %589 = vmatprep.subr.bf16.mxu0 0
    %590 = vmatpush1.bf16.msra.mxu0 0
    %591 = vmatprep.subr.bf16.mxu0 0
    %592 = vmatpush1.bf16.msra.mxu0 0
    %593 = vmatprep.subr.bf16.mxu0 0
    %594 = vmatpush1.bf16.msra.mxu0 0
    %595 = vmatprep.subr.bf16.mxu0 0
    %596 = vmatpush1.bf16.msra.mxu0 0
    %597 = vmatprep.subr.bf16.mxu0 0
    %598 = vmatpush1.bf16.msra.mxu0 0
    %599 = vmatprep.subr.bf16.mxu0 0
    %600 = vmatpush1.bf16.msra.mxu0 0
    %601 = vmatprep.subr.bf16.mxu0 0
    %602 = vmatpush1.bf16.msra.mxu0 0
    %603 = vmatprep.subr.bf16.mxu0 0
    %604 = vmatpush1.bf16.msra.mxu0 0
    %605 = vmatprep.subr.bf16.mxu0 0
    %606 = vmatpush1.bf16.msra.mxu0 0
    %607 = vmatprep.subr.bf16.mxu0 0
    %608 = vmatpush1.bf16.msra.mxu0 0
    %609 = vmatprep.subr.bf16.mxu0 0
    %610 = vmatpush1.bf16.msra.mxu0 0
    %611 = vmatprep.mubr.bf16.mxu0 0
    %612 = vmatmul.mubr.bf16.gmra.mrb[0].mxu0 %v577
    %v613 = vpop.f32.mrb[0].mxu0
    %v614 = vadd.f32 0.0, %v613
    %v615 = vpop.f32.mrb[0].mxu0
    %v616 = vpop.f32.mrb[0].mxu0
    %v617 = vpop.f32.mrb[0].mxu0
    %618 = vdwg.mxu0
    %v619 = vadd.f32 %v205, %v614
    %v620 = vxor.u32 %v619, 2147483648
    %v621 = vmul.f32 %v620, 1.442695
    %v622 = vpow.pop %v621
    %v623 = vadd.f32 %v622, 1.0
    %v624 = vrcp.pop %v623
    %v625 = vmul.f32 1.0, %v624
    %v626 = vtanh.pop %v619
    %v627 = vmul.f32 %v625, %v552
    %629 = vrot.lane.b32.xlu0 %v626, 64
    %v630 = vpop.permute.xlu0 %629
    %v632 = vmul.f32 %v625, %v630
    %634 = vrot.lane.b32.xlu0 %v632, 32
    %v635 = vpop.permute.xlu0 %634
    %v637 = vadd.f32 %v627, %v635
    %v638 = vtanh.pop %v637
    %640 = vrot.lane.b32.xlu0 %v638, 64
    %v641 = vpop.permute.xlu0 %640
    %v643 = vmul.f32 %v625, %v641
    %v646 = vunpack.c.l.s4 1983009808
    %v647 = vunpack.c.0.s8 %v646
    %v648 = vlaneseq
    %v649 = vshrl.u32 %v648, 7
    %v650 = vsub.s32 %v647, %v649
    %v651 = vrot.slane %v643, %v650
    %652 = vrot.lane.b32.xlu0 %v651, 32
    %v653 = vpop.permute.xlu0 %652
    %s655 = scalar_lea.vmem [#allocation2], 8
    %656 = vst.msk [vmem:[%s655] sm:$0x3] %vm315, %v653
    %v657 = vpack.c.bf16 %v643, %v643
    %659 = vrot.lane.b32.xlu0 %v657, 32
    %v660 = vpop.permute.xlu0 %659
    %v662 = vsel %vm235, %v660, 0
    %664 = vmatprep.subr.bf16.mxu0 0
    %665 = vmatpush1.bf16.msra.mxu0 %v231
    %666 = vmatprep.subr.bf16.mxu0 0
    %667 = vmatpush1.bf16.msra.mxu0 %v232
    %668 = vmatprep.subr.bf16.mxu0 0
    %669 = vmatpush1.bf16.msra.mxu0 0
    %670 = vmatprep.subr.bf16.mxu0 0
    %671 = vmatpush1.bf16.msra.mxu0 0
    %672 = vmatprep.subr.bf16.mxu0 0
    %673 = vmatpush1.bf16.msra.mxu0 0
    %674 = vmatprep.subr.bf16.mxu0 0
    %675 = vmatpush1.bf16.msra.mxu0 0
    %676 = vmatprep.subr.bf16.mxu0 0
    %677 = vmatpush1.bf16.msra.mxu0 0
    %678 = vmatprep.subr.bf16.mxu0 0
    %679 = vmatpush1.bf16.msra.mxu0 0
    %680 = vmatprep.subr.bf16.mxu0 0
    %681 = vmatpush1.bf16.msra.mxu0 0
    %682 = vmatprep.subr.bf16.mxu0 0
    %683 = vmatpush1.bf16.msra.mxu0 0
    %684 = vmatprep.subr.bf16.mxu0 0
    %685 = vmatpush1.bf16.msra.mxu0 0
    %686 = vmatprep.subr.bf16.mxu0 0
    %687 = vmatpush1.bf16.msra.mxu0 0
    %688 = vmatprep.subr.bf16.mxu0 0
    %689 = vmatpush1.bf16.msra.mxu0 0
    %690 = vmatprep.subr.bf16.mxu0 0
    %691 = vmatpush1.bf16.msra.mxu0 0
    %692 = vmatprep.subr.bf16.mxu0 0
    %693 = vmatpush1.bf16.msra.mxu0 0
    %694 = vmatprep.subr.bf16.mxu0 0
    %695 = vmatpush1.bf16.msra.mxu0 0
    %696 = vmatprep.mubr.bf16.mxu0 0
    %697 = vmatmul.mubr.bf16.gmra.mrb[0].mxu0 %v662
    %v698 = vpop.f32.mrb[0].mxu0
    %v699 = vadd.f32 0.0, %v698
    %v700 = vpop.f32.mrb[0].mxu0
    %v701 = vpop.f32.mrb[0].mxu0
    %v702 = vpop.f32.mrb[0].mxu0
    %703 = vdwg.mxu0
    %v704 = vadd.f32 %v213, %v699
    %v705 = vxor.u32 %v704, 2147483648
    %v706 = vmul.f32 %v705, 1.442695
    %v707 = vpow.pop %v706
    %v708 = vadd.f32 %v707, 1.0
    %v709 = vrcp.pop %v708
    %v710 = vmul.f32 1.0, %v709
    %v711 = vtanh.pop %v704
    %v712 = vmul.f32 %v710, %v637
    %714 = vrot.lane.b32.xlu0 %v711, 64
    %v715 = vpop.permute.xlu0 %714
    %v717 = vmul.f32 %v710, %v715
    %719 = vrot.lane.b32.xlu0 %v717, 32
    %v720 = vpop.permute.xlu0 %719
    %v722 = vadd.f32 %v712, %v720
    %v723 = vtanh.pop %v722
    %725 = vrot.lane.b32.xlu0 %v723, 64
    %v726 = vpop.permute.xlu0 %725
    %v728 = vmul.f32 %v710, %v726
    %v731 = vunpack.c.l.s4 1983009808
    %v732 = vunpack.c.0.s8 %v731
    %v733 = vlaneseq
    %v734 = vshrl.u32 %v733, 7
    %v735 = vsub.s32 %v732, %v734
    %v736 = vrot.slane %v728, %v735
    %737 = vrot.lane.b32.xlu0 %v736, 32
    %v738 = vpop.permute.xlu0 %737
    %s740 = scalar_lea.vmem [#allocation2], 10
    %741 = vst.msk [vmem:[%s740] sm:$0x3] %vm315, %v738
    %v742 = vpack.c.bf16 %v728, %v728
    %744 = vrot.lane.b32.xlu0 %v742, 32
    %v745 = vpop.permute.xlu0 %744
    %v747 = vsel %vm235, %v745, 0
    %749 = vmatprep.subr.bf16.mxu0 0
    %750 = vmatpush1.bf16.msra.mxu0 %v231
    %751 = vmatprep.subr.bf16.mxu0 0
    %752 = vmatpush1.bf16.msra.mxu0 %v232
    %753 = vmatprep.subr.bf16.mxu0 0
    %754 = vmatpush1.bf16.msra.mxu0 0
    %755 = vmatprep.subr.bf16.mxu0 0
    %756 = vmatpush1.bf16.msra.mxu0 0
    %757 = vmatprep.subr.bf16.mxu0 0
    %758 = vmatpush1.bf16.msra.mxu0 0
    %759 = vmatprep.subr.bf16.mxu0 0
    %760 = vmatpush1.bf16.msra.mxu0 0
    %761 = vmatprep.subr.bf16.mxu0 0
    %762 = vmatpush1.bf16.msra.mxu0 0
    %763 = vmatprep.subr.bf16.mxu0 0
    %764 = vmatpush1.bf16.msra.mxu0 0
    %765 = vmatprep.subr.bf16.mxu0 0
    %766 = vmatpush1.bf16.msra.mxu0 0
    %767 = vmatprep.subr.bf16.mxu0 0
    %768 = vmatpush1.bf16.msra.mxu0 0
    %769 = vmatprep.subr.bf16.mxu0 0
    %770 = vmatpush1.bf16.msra.mxu0 0
    %771 = vmatprep.subr.bf16.mxu0 0
    %772 = vmatpush1.bf16.msra.mxu0 0
    %773 = vmatprep.subr.bf16.mxu0 0
    %774 = vmatpush1.bf16.msra.mxu0 0
    %775 = vmatprep.subr.bf16.mxu0 0
    %776 = vmatpush1.bf16.msra.mxu0 0
    %777 = vmatprep.subr.bf16.mxu0 0
    %778 = vmatpush1.bf16.msra.mxu0 0
    %779 = vmatprep.subr.bf16.mxu0 0
    %780 = vmatpush1.bf16.msra.mxu0 0
    %781 = vmatprep.mubr.bf16.mxu0 0
    %782 = vmatmul.mubr.bf16.gmra.mrb[0].mxu0 %v747
    %v783 = vpop.f32.mrb[0].mxu0
    %v784 = vadd.f32 0.0, %v783
    %v785 = vpop.f32.mrb[0].mxu0
    %v786 = vpop.f32.mrb[0].mxu0
    %v787 = vpop.f32.mrb[0].mxu0
    %788 = vdwg.mxu0
    %v789 = vadd.f32 %v212, %v784
    %v790 = vxor.u32 %v789, 2147483648
    %v791 = vmul.f32 %v790, 1.442695
    %v792 = vpow.pop %v791
    %v793 = vadd.f32 %v792, 1.0
    %v794 = vrcp.pop %v793
    %v795 = vmul.f32 1.0, %v794
    %v796 = vtanh.pop %v789
    %v797 = vmul.f32 %v795, %v722
    %799 = vrot.lane.b32.xlu0 %v796, 64
    %v800 = vpop.permute.xlu0 %799
    %v802 = vmul.f32 %v795, %v800
    %804 = vrot.lane.b32.xlu0 %v802, 32
    %v805 = vpop.permute.xlu0 %804
    %v807 = vadd.f32 %v797, %v805
    %v808 = vtanh.pop %v807
    %810 = vrot.lane.b32.xlu0 %v808, 64
    %v811 = vpop.permute.xlu0 %810
    %v813 = vmul.f32 %v795, %v811
    %v816 = vunpack.c.l.s4 1983009808
    %v817 = vunpack.c.0.s8 %v816
    %v818 = vlaneseq
    %v819 = vshrl.u32 %v818, 7
    %v820 = vsub.s32 %v817, %v819
    %v821 = vrot.slane %v813, %v820
    %822 = vrot.lane.b32.xlu0 %v821, 32
    %v823 = vpop.permute.xlu0 %822
    %s825 = scalar_lea.vmem [#allocation2], 12
    %826 = vst.msk [vmem:[%s825] sm:$0x3] %vm315, %v823
    %v827 = vpack.c.bf16 %v813, %v813
    %829 = vrot.lane.b32.xlu0 %v827, 32
    %v830 = vpop.permute.xlu0 %829
    %v832 = vsel %vm235, %v830, 0
    %834 = vmatprep.subr.bf16.mxu0 0
    %835 = vmatpush1.bf16.msra.mxu0 %v231
    %836 = vmatprep.subr.bf16.mxu0 0
    %837 = vmatpush1.bf16.msra.mxu0 %v232
    %838 = vmatprep.subr.bf16.mxu0 0
    %839 = vmatpush1.bf16.msra.mxu0 0
    %840 = vmatprep.subr.bf16.mxu0 0
    %841 = vmatpush1.bf16.msra.mxu0 0
    %842 = vmatprep.subr.bf16.mxu0 0
    %843 = vmatpush1.bf16.msra.mxu0 0
    %844 = vmatprep.subr.bf16.mxu0 0
    %845 = vmatpush1.bf16.msra.mxu0 0
    %846 = vmatprep.subr.bf16.mxu0 0
    %847 = vmatpush1.bf16.msra.mxu0 0
    %848 = vmatprep.subr.bf16.mxu0 0
    %849 = vmatpush1.bf16.msra.mxu0 0
    %850 = vmatprep.subr.bf16.mxu0 0
    %851 = vmatpush1.bf16.msra.mxu0 0
    %852 = vmatprep.subr.bf16.mxu0 0
    %853 = vmatpush1.bf16.msra.mxu0 0
    %854 = vmatprep.subr.bf16.mxu0 0
    %855 = vmatpush1.bf16.msra.mxu0 0
    %856 = vmatprep.subr.bf16.mxu0 0
    %857 = vmatpush1.bf16.msra.mxu0 0
    %858 = vmatprep.subr.bf16.mxu0 0
    %859 = vmatpush1.bf16.msra.mxu0 0
    %860 = vmatprep.subr.bf16.mxu0 0
    %861 = vmatpush1.bf16.msra.mxu0 0
    %862 = vmatprep.subr.bf16.mxu0 0
    %863 = vmatpush1.bf16.msra.mxu0 0
    %864 = vmatprep.subr.bf16.mxu0 0
    %865 = vmatpush1.bf16.msra.mxu0 0
    %866 = vmatprep.mubr.bf16.mxu0 0
    %867 = vmatmul.mubr.bf16.gmra.mrb[0].mxu0 %v832
    %v868 = vpop.f32.mrb[0].mxu0
    %v869 = vadd.f32 0.0, %v868
    %v870 = vpop.f32.mrb[0].mxu0
    %v871 = vpop.f32.mrb[0].mxu0
    %v872 = vpop.f32.mrb[0].mxu0
    %873 = vdwg.mxu0
    %v874 = vadd.f32 %v214, %v869
    %v875 = vxor.u32 %v874, 2147483648
    %v876 = vmul.f32 %v875, 1.442695
    %v877 = vpow.pop %v876
    %v878 = vadd.f32 %v877, 1.0
    %v879 = vrcp.pop %v878
    %v880 = vmul.f32 1.0, %v879
    %v881 = vtanh.pop %v874
    %v882 = vmul.f32 %v880, %v807
    %884 = vrot.lane.b32.xlu0 %v881, 64
    %v885 = vpop.permute.xlu0 %884
    %v887 = vmul.f32 %v880, %v885
    %889 = vrot.lane.b32.xlu0 %v887, 32
    %v890 = vpop.permute.xlu0 %889
    %v892 = vadd.f32 %v882, %v890
    %v893 = vtanh.pop %v892
    %895 = vrot.lane.b32.xlu0 %v893, 64
    %v896 = vpop.permute.xlu0 %895
    %v898 = vmul.f32 %v880, %v896
    %v901 = vunpack.c.l.s4 1983009808
    %v902 = vunpack.c.0.s8 %v901
    %v903 = vlaneseq
    %v904 = vshrl.u32 %v903, 7
    %v905 = vsub.s32 %v902, %v904
    %v906 = vrot.slane %v898, %v905
    %907 = vrot.lane.b32.xlu0 %v906, 32
    %v908 = vpop.permute.xlu0 %907
    %s910 = scalar_lea.vmem [#allocation2], 14
    %911 = vst.msk [vmem:[%s910] sm:$0x3] %vm315, %v908
    %v912 = vld [vmem:[%s4] sm:$0xf]
    %v913 = vld [vmem:[%s4 + $0x4] sm:$0xf]
    %v914 = vld [vmem:[%s4 + $0x8] sm:$0xf]
    %v915 = vld [vmem:[%s4 + $0xc] sm:$0xf]
    %v916 = vld [vmem:[%s5] sm:$0xf]
    %v917 = vld [vmem:[%s5 + $0x4] sm:$0xf]
    %v918 = vld [vmem:[%s5 + $0x8] sm:$0xf]
    %v919 = vld [vmem:[%s5 + $0xc] sm:$0xf]
    %v920 = vld [vmem:[%s6] sm:$0x1]
    %v921 = vld [vmem:[#allocation2] sm:$0x3]
    %v922 = vld [vmem:[#allocation2 + $0x2] sm:$0x3]
    %v923 = vld [vmem:[#allocation2 + $0x4] sm:$0x3]
    %v924 = vld [vmem:[#allocation2 + $0x6] sm:$0x3]
    %v925 = vld [vmem:[#allocation2 + $0x8] sm:$0x3]
    %v926 = vld [vmem:[#allocation2 + $0xa] sm:$0x3]
    %v927 = vld [vmem:[#allocation2 + $0xc] sm:$0x3]
    %v928 = vld [vmem:[#allocation2 + $0xe] sm:$0x3]
    %v929 = vpack.c.bf16 %v921, %v921
    %v930 = vpack.c.bf16 %v922, %v922
    %v931 = vpack.c.bf16 %v923, %v923
    %v932 = vpack.c.bf16 %v924, %v924
    %v933 = vpack.c.bf16 %v925, %v925
    %v934 = vpack.c.bf16 %v926, %v926
    %v935 = vpack.c.bf16 %v927, %v927
    %v936 = vpack.c.bf16 %v928, %v928
    %v938 = vlaneseq
    %v939 = vshrl.u32 %v938, 7
    %v940 = vsub.s32 0, %v939
    %v941 = vrot.slane %v920, %v940
    %v951 = vcombine.low %v929, %v930
    %v952 = vcombine.low %v931, %v932
    %v953 = vcombine.low %v933, %v934
    %v954 = vcombine.low %v935, %v936
    %v956 = vunpack.c.l.s4 1966171168
    %v957 = vunpack.c.0.s8 %v956
    %v958 = vlaneseq
    %v959 = vshrl.u32 %v958, 7
    %v960 = vsub.s32 %v957, %v959
    %v961 = vrot.slane %v951, %v960
    %v963 = vunpack.c.l.s4 1966171168
    %v964 = vunpack.c.0.s8 %v963
    %v965 = vlaneseq
    %v966 = vshrl.u32 %v965, 7
    %v967 = vsub.s32 %v964, %v966
    %v968 = vrot.slane %v952, %v967
    %v970 = vunpack.c.l.s4 1966171168
    %v971 = vunpack.c.0.s8 %v970
    %v972 = vlaneseq
    %v973 = vshrl.u32 %v972, 7
    %v974 = vsub.s32 %v971, %v973
    %v975 = vrot.slane %v953, %v974
    %v977 = vunpack.c.l.s4 1966171168
    %v978 = vunpack.c.0.s8 %v977
    %v979 = vlaneseq
    %v980 = vshrl.u32 %v979, 7
    %v981 = vsub.s32 %v978, %v980
    %v982 = vrot.slane %v954, %v981
    %v983 = vcombine.low %v961, %v968
    %v984 = vcombine.low %v975, %v982
    %v986 = vunpack.c.l.s4 1966171168
    %v987 = vunpack.c.0.s8 %v986
    %v988 = vlaneseq
    %v989 = vshrl.u32 %v988, 7
    %v990 = vsub.s32 %v987, %v989
    %v991 = vrot.slane %v983, %v990
    %v993 = vunpack.c.l.s4 1966171168
    %v994 = vunpack.c.0.s8 %v993
    %v995 = vlaneseq
    %v996 = vshrl.u32 %v995, 7
    %v997 = vsub.s32 %v994, %v996
    %v998 = vrot.slane %v984, %v997
    %v999 = vcombine.low %v991, %v998
    %v1004 = vunpack.c.l.b16 %v912
    %v1005 = vunpack.c.l.b16 %v913
    %v1006 = vunpack.c.l.b16 %v914
    %v1007 = vunpack.c.l.b16 %v915
    %v1008 = vpack.c.b16 %v1005, %v1004
    %v1009 = vpack.c.b16 %v1007, %v1006
    %v1013 = vsel %vm235, %v999, 0
    %1015 = vmatprep.subr.bf16.mxu0 0
    %1016 = vmatpush1.bf16.msra.mxu0 %v1008
    %1017 = vmatprep.subr.bf16.mxu0 0
    %1018 = vmatpush1.bf16.msra.mxu0 %v1009
    %1019 = vmatprep.subr.bf16.mxu0 0
    %1020 = vmatpush1.bf16.msra.mxu0 0
    %1021 = vmatprep.subr.bf16.mxu0 0
    %1022 = vmatpush1.bf16.msra.mxu0 0
    %1023 = vmatprep.subr.bf16.mxu0 0
    %1024 = vmatpush1.bf16.msra.mxu0 0
    %1025 = vmatprep.subr.bf16.mxu0 0
    %1026 = vmatpush1.bf16.msra.mxu0 0
    %1027 = vmatprep.subr.bf16.mxu0 0
    %1028 = vmatpush1.bf16.msra.mxu0 0
    %1029 = vmatprep.subr.bf16.mxu0 0
    %1030 = vmatpush1.bf16.msra.mxu0 0
    %1031 = vmatprep.subr.bf16.mxu0 0
    %1032 = vmatpush1.bf16.msra.mxu0 0
    %1033 = vmatprep.subr.bf16.mxu0 0
    %1034 = vmatpush1.bf16.msra.mxu0 0
    %1035 = vmatprep.subr.bf16.mxu0 0
    %1036 = vmatpush1.bf16.msra.mxu0 0
    %1037 = vmatprep.subr.bf16.mxu0 0
    %1038 = vmatpush1.bf16.msra.mxu0 0
    %1039 = vmatprep.subr.bf16.mxu0 0
    %1040 = vmatpush1.bf16.msra.mxu0 0
    %1041 = vmatprep.subr.bf16.mxu0 0
    %1042 = vmatpush1.bf16.msra.mxu0 0
    %1043 = vmatprep.subr.bf16.mxu0 0
    %1044 = vmatpush1.bf16.msra.mxu0 0
    %1045 = vmatprep.subr.bf16.mxu0 0
    %1046 = vmatpush1.bf16.msra.mxu0 0
    %1047 = vmatprep.mubr.bf16.mxu0 0
    %1048 = vmatmul.mubr.bf16.gmra.mrb[0].mxu0 %v1013
    %v1049 = vpop.f32.mrb[0].mxu0
    %v1050 = vadd.f32 %v941, %v1049
    %v1051 = vpop.f32.mrb[0].mxu0
    %v1052 = vpop.f32.mrb[0].mxu0
    %v1053 = vadd.f32 %v941, %v1052
    %v1054 = vpop.f32.mrb[0].mxu0
    %1055 = vdwg.mxu0
    %v1058 = vcombine.high %v1050, %v1050
    %v1060 = vunpack.c.l.s4 1983009808
    %v1061 = vunpack.c.0.s8 %v1060
    %v1062 = vlaneseq
    %v1063 = vshrl.u32 %v1062, 7
    %v1064 = vsub.s32 %v1061, %v1063
    %v1065 = vrot.slane %v1050, %v1064
    %v1067 = vunpack.c.l.s4 1983009808
    %v1068 = vunpack.c.0.s8 %v1067
    %v1069 = vlaneseq
    %v1070 = vshrl.u32 %v1069, 7
    %v1071 = vsub.s32 %v1068, %v1070
    %v1072 = vrot.slane %v1058, %v1071
    %v1073 = vcombine.high %v1065, %v1065
    %v1074 = vcombine.high %v1072, %v1072
    %v1075 = vcombine.high %v1053, %v1053
    %v1077 = vunpack.c.l.s4 1983009808
    %v1078 = vunpack.c.0.s8 %v1077
    %v1079 = vlaneseq
    %v1080 = vshrl.u32 %v1079, 7
    %v1081 = vsub.s32 %v1078, %v1080
    %v1082 = vrot.slane %v1053, %v1081
    %v1084 = vunpack.c.l.s4 1983009808
    %v1085 = vunpack.c.0.s8 %v1084
    %v1086 = vlaneseq
    %v1087 = vshrl.u32 %v1086, 7
    %v1088 = vsub.s32 %v1085, %v1087
    %v1089 = vrot.slane %v1075, %v1088
    %v1090 = vcombine.high %v1082, %v1082
    %v1091 = vcombine.high %v1089, %v1089
    %v1104 = vunpack.c.l.b16 %v916
    %v1105 = vunpack.c.l.b16 %v917
    %v1106 = vunpack.c.l.b16 %v918
    %v1107 = vunpack.c.l.b16 %v919
    %v1108 = vpack.c.b16 %v1105, %v1104
    %v1109 = vpack.c.b16 %v1107, %v1106
    %1112 = vmatprep.subr.bf16.mxu0 0
    %1113 = vmatpush1.bf16.msra.mxu0 %v1108
    %1114 = vmatprep.subr.bf16.mxu0 0
    %1115 = vmatpush1.bf16.msra.mxu0 %v1109
    %1116 = vmatprep.subr.bf16.mxu0 0
    %1117 = vmatpush1.bf16.msra.mxu0 0
    %1118 = vmatprep.subr.bf16.mxu0 0
    %1119 = vmatpush1.bf16.msra.mxu0 0
    %1120 = vmatprep.subr.bf16.mxu0 0
    %1121 = vmatpush1.bf16.msra.mxu0 0
    %1122 = vmatprep.subr.bf16.mxu0 0
    %1123 = vmatpush1.bf16.msra.mxu0 0
    %1124 = vmatprep.subr.bf16.mxu0 0
    %1125 = vmatpush1.bf16.msra.mxu0 0
    %1126 = vmatprep.subr.bf16.mxu0 0
    %1127 = vmatpush1.bf16.msra.mxu0 0
    %1128 = vmatprep.subr.bf16.mxu0 0
    %1129 = vmatpush1.bf16.msra.mxu0 0
    %1130 = vmatprep.subr.bf16.mxu0 0
    %1131 = vmatpush1.bf16.msra.mxu0 0
    %1132 = vmatprep.subr.bf16.mxu0 0
    %1133 = vmatpush1.bf16.msra.mxu0 0
    %1134 = vmatprep.subr.bf16.mxu0 0
    %1135 = vmatpush1.bf16.msra.mxu0 0
    %1136 = vmatprep.subr.bf16.mxu0 0
    %1137 = vmatpush1.bf16.msra.mxu0 0
    %1138 = vmatprep.subr.bf16.mxu0 0
    %1139 = vmatpush1.bf16.msra.mxu0 0
    %1140 = vmatprep.subr.bf16.mxu0 0
    %1141 = vmatpush1.bf16.msra.mxu0 0
    %1142 = vmatprep.subr.bf16.mxu0 0
    %1143 = vmatpush1.bf16.msra.mxu0 0
    %1144 = vmatprep.mubr.bf16.mxu0 0
    %1145 = vmatmul.mubr.bf16.gmra.mrb[0].mxu0 %v237
    %v1146 = vpop.f32.mrb[0].mxu0
    %v1147 = vadd.f32 0.0, %v1146
    %v1148 = vpop.f32.mrb[0].mxu0
    %v1149 = vpop.f32.mrb[0].mxu0
    %v1150 = vpop.f32.mrb[0].mxu0
    %1151 = vdwg.mxu0
    %v1152 = vadd.f32 %v1065, %v1147
    %v1153 = vxor.u32 %v1152, 2147483648
    %v1154 = vmul.f32 %v1153, 1.442695
    %v1155 = vpow.pop %v1154
    %v1156 = vadd.f32 %v1155, 1.0
    %v1157 = vrcp.pop %v1156
    %v1158 = vmul.f32 1.0, %v1157
    %v1159 = vtanh.pop %v1152
    %v1160 = vmul.f32 %v1158, 0.0
    %1162 = vrot.lane.b32.xlu0 %v1159, 64
    %v1163 = vpop.permute.xlu0 %1162
    %v1165 = vmul.f32 %v1158, %v1163
    %1167 = vrot.lane.b32.xlu0 %v1165, 32
    %v1168 = vpop.permute.xlu0 %1167
    %v1170 = vadd.f32 %v1160, %v1168
    %v1171 = vtanh.pop %v1170
    %1173 = vrot.lane.b32.xlu0 %v1171, 64
    %v1174 = vpop.permute.xlu0 %1173
    %v1176 = vmul.f32 %v1158, %v1174
    %v1179 = vunpack.c.l.s4 1983009808
    %v1180 = vunpack.c.0.s8 %v1179
    %v1181 = vlaneseq
    %v1182 = vshrl.u32 %v1181, 7
    %v1183 = vsub.s32 %v1180, %v1182
    %v1184 = vrot.slane %v1176, %v1183
    %1185 = vrot.lane.b32.xlu0 %v1184, 32
    %v1186 = vpop.permute.xlu0 %1185
    %1188 = vst.msk [vmem:[#allocation2] sm:$0x3] %vm315, %v1186
    %v1189 = vpack.c.bf16 %v1176, %v1176
    %1191 = vrot.lane.b32.xlu0 %v1189, 32
    %v1192 = vpop.permute.xlu0 %1191
    %v1194 = vsel %vm235, %v1192, 0
    %1196 = vmatprep.subr.bf16.mxu0 0
    %1197 = vmatpush1.bf16.msra.mxu0 %v1108
    %1198 = vmatprep.subr.bf16.mxu0 0
    %1199 = vmatpush1.bf16.msra.mxu0 %v1109
    %1200 = vmatprep.subr.bf16.mxu0 0
    %1201 = vmatpush1.bf16.msra.mxu0 0
    %1202 = vmatprep.subr.bf16.mxu0 0
    %1203 = vmatpush1.bf16.msra.mxu0 0
    %1204 = vmatprep.subr.bf16.mxu0 0
    %1205 = vmatpush1.bf16.msra.mxu0 0
    %1206 = vmatprep.subr.bf16.mxu0 0
    %1207 = vmatpush1.bf16.msra.mxu0 0
    %1208 = vmatprep.subr.bf16.mxu0 0
    %1209 = vmatpush1.bf16.msra.mxu0 0
    %1210 = vmatprep.subr.bf16.mxu0 0
    %1211 = vmatpush1.bf16.msra.mxu0 0
    %1212 = vmatprep.subr.bf16.mxu0 0
    %1213 = vmatpush1.bf16.msra.mxu0 0
    %1214 = vmatprep.subr.bf16.mxu0 0
    %1215 = vmatpush1.bf16.msra.mxu0 0
    %1216 = vmatprep.subr.bf16.mxu0 0
    %1217 = vmatpush1.bf16.msra.mxu0 0
    %1218 = vmatprep.subr.bf16.mxu0 0
    %1219 = vmatpush1.bf16.msra.mxu0 0
    %1220 = vmatprep.subr.bf16.mxu0 0
    %1221 = vmatpush1.bf16.msra.mxu0 0
    %1222 = vmatprep.subr.bf16.mxu0 0
    %1223 = vmatpush1.bf16.msra.mxu0 0
    %1224 = vmatprep.subr.bf16.mxu0 0
    %1225 = vmatpush1.bf16.msra.mxu0 0
    %1226 = vmatprep.subr.bf16.mxu0 0
    %1227 = vmatpush1.bf16.msra.mxu0 0
    %1228 = vmatprep.mubr.bf16.mxu0 0
    %1229 = vmatmul.mubr.bf16.gmra.mrb[0].mxu0 %v1194
    %v1230 = vpop.f32.mrb[0].mxu0
    %v1231 = vadd.f32 0.0, %v1230
    %v1232 = vpop.f32.mrb[0].mxu0
    %v1233 = vpop.f32.mrb[0].mxu0
    %v1234 = vpop.f32.mrb[0].mxu0
    %1235 = vdwg.mxu0
    %v1236 = vadd.f32 %v1073, %v1231
    %v1237 = vxor.u32 %v1236, 2147483648
    %v1238 = vmul.f32 %v1237, 1.442695
    %v1239 = vpow.pop %v1238
    %v1240 = vadd.f32 %v1239, 1.0
    %v1241 = vrcp.pop %v1240
    %v1242 = vmul.f32 1.0, %v1241
    %v1243 = vtanh.pop %v1236
    %v1244 = vmul.f32 %v1242, %v1170
    %1246 = vrot.lane.b32.xlu0 %v1243, 64
    %v1247 = vpop.permute.xlu0 %1246
    %v1249 = vmul.f32 %v1242, %v1247
    %1251 = vrot.lane.b32.xlu0 %v1249, 32
    %v1252 = vpop.permute.xlu0 %1251
    %v1254 = vadd.f32 %v1244, %v1252
    %v1255 = vtanh.pop %v1254
    %1257 = vrot.lane.b32.xlu0 %v1255, 64
    %v1258 = vpop.permute.xlu0 %1257
    %v1260 = vmul.f32 %v1242, %v1258
    %v1263 = vunpack.c.l.s4 1983009808
    %v1264 = vunpack.c.0.s8 %v1263
    %v1265 = vlaneseq
    %v1266 = vshrl.u32 %v1265, 7
    %v1267 = vsub.s32 %v1264, %v1266
    %v1268 = vrot.slane %v1260, %v1267
    %1269 = vrot.lane.b32.xlu0 %v1268, 32
    %v1270 = vpop.permute.xlu0 %1269
    %1272 = vst.msk [vmem:[%s400] sm:$0x3] %vm315, %v1270
    %v1273 = vpack.c.bf16 %v1260, %v1260
    %1275 = vrot.lane.b32.xlu0 %v1273, 32
    %v1276 = vpop.permute.xlu0 %1275
    %v1278 = vsel %vm235, %v1276, 0
    %1280 = vmatprep.subr.bf16.mxu0 0
    %1281 = vmatpush1.bf16.msra.mxu0 %v1108
    %1282 = vmatprep.subr.bf16.mxu0 0
    %1283 = vmatpush1.bf16.msra.mxu0 %v1109
    %1284 = vmatprep.subr.bf16.mxu0 0
    %1285 = vmatpush1.bf16.msra.mxu0 0
    %1286 = vmatprep.subr.bf16.mxu0 0
    %1287 = vmatpush1.bf16.msra.mxu0 0
    %1288 = vmatprep.subr.bf16.mxu0 0
    %1289 = vmatpush1.bf16.msra.mxu0 0
    %1290 = vmatprep.subr.bf16.mxu0 0
    %1291 = vmatpush1.bf16.msra.mxu0 0
    %1292 = vmatprep.subr.bf16.mxu0 0
    %1293 = vmatpush1.bf16.msra.mxu0 0
    %1294 = vmatprep.subr.bf16.mxu0 0
    %1295 = vmatpush1.bf16.msra.mxu0 0
    %1296 = vmatprep.subr.bf16.mxu0 0
    %1297 = vmatpush1.bf16.msra.mxu0 0
    %1298 = vmatprep.subr.bf16.mxu0 0
    %1299 = vmatpush1.bf16.msra.mxu0 0
    %1300 = vmatprep.subr.bf16.mxu0 0
    %1301 = vmatpush1.bf16.msra.mxu0 0
    %1302 = vmatprep.subr.bf16.mxu0 0
    %1303 = vmatpush1.bf16.msra.mxu0 0
    %1304 = vmatprep.subr.bf16.mxu0 0
    %1305 = vmatpush1.bf16.msra.mxu0 0
    %1306 = vmatprep.subr.bf16.mxu0 0
    %1307 = vmatpush1.bf16.msra.mxu0 0
    %1308 = vmatprep.subr.bf16.mxu0 0
    %1309 = vmatpush1.bf16.msra.mxu0 0
    %1310 = vmatprep.subr.bf16.mxu0 0
    %1311 = vmatpush1.bf16.msra.mxu0 0
    %1312 = vmatprep.mubr.bf16.mxu0 0
    %1313 = vmatmul.mubr.bf16.gmra.mrb[0].mxu0 %v1278
    %v1314 = vpop.f32.mrb[0].mxu0
    %v1315 = vadd.f32 0.0, %v1314
    %v1316 = vpop.f32.mrb[0].mxu0
    %v1317 = vpop.f32.mrb[0].mxu0
    %v1318 = vpop.f32.mrb[0].mxu0
    %1319 = vdwg.mxu0
    %v1320 = vadd.f32 %v1072, %v1315
    %v1321 = vxor.u32 %v1320, 2147483648
    %v1322 = vmul.f32 %v1321, 1.442695
    %v1323 = vpow.pop %v1322
    %v1324 = vadd.f32 %v1323, 1.0
    %v1325 = vrcp.pop %v1324
    %v1326 = vmul.f32 1.0, %v1325
    %v1327 = vtanh.pop %v1320
    %v1328 = vmul.f32 %v1326, %v1254
    %1330 = vrot.lane.b32.xlu0 %v1327, 64
    %v1331 = vpop.permute.xlu0 %1330
    %v1333 = vmul.f32 %v1326, %v1331
    %1335 = vrot.lane.b32.xlu0 %v1333, 32
    %v1336 = vpop.permute.xlu0 %1335
    %v1338 = vadd.f32 %v1328, %v1336
    %v1339 = vtanh.pop %v1338
    %1341 = vrot.lane.b32.xlu0 %v1339, 64
    %v1342 = vpop.permute.xlu0 %1341
    %v1344 = vmul.f32 %v1326, %v1342
    %v1347 = vunpack.c.l.s4 1983009808
    %v1348 = vunpack.c.0.s8 %v1347
    %v1349 = vlaneseq
    %v1350 = vshrl.u32 %v1349, 7
    %v1351 = vsub.s32 %v1348, %v1350
    %v1352 = vrot.slane %v1344, %v1351
    %1353 = vrot.lane.b32.xlu0 %v1352, 32
    %v1354 = vpop.permute.xlu0 %1353
    %1356 = vst.msk [vmem:[%s485] sm:$0x3] %vm315, %v1354
    %v1357 = vpack.c.bf16 %v1344, %v1344
    %1359 = vrot.lane.b32.xlu0 %v1357, 32
    %v1360 = vpop.permute.xlu0 %1359
    %v1362 = vsel %vm235, %v1360, 0
    %1364 = vmatprep.subr.bf16.mxu0 0
    %1365 = vmatpush1.bf16.msra.mxu0 %v1108
    %1366 = vmatprep.subr.bf16.mxu0 0
    %1367 = vmatpush1.bf16.msra.mxu0 %v1109
    %1368 = vmatprep.subr.bf16.mxu0 0
    %1369 = vmatpush1.bf16.msra.mxu0 0
    %1370 = vmatprep.subr.bf16.mxu0 0
    %1371 = vmatpush1.bf16.msra.mxu0 0
    %1372 = vmatprep.subr.bf16.mxu0 0
    %1373 = vmatpush1.bf16.msra.mxu0 0
    %1374 = vmatprep.subr.bf16.mxu0 0
    %1375 = vmatpush1.bf16.msra.mxu0 0
    %1376 = vmatprep.subr.bf16.mxu0 0
    %1377 = vmatpush1.bf16.msra.mxu0 0
    %1378 = vmatprep.subr.bf16.mxu0 0
    %1379 = vmatpush1.bf16.msra.mxu0 0
    %1380 = vmatprep.subr.bf16.mxu0 0
    %1381 = vmatpush1.bf16.msra.mxu0 0
    %1382 = vmatprep.subr.bf16.mxu0 0
    %1383 = vmatpush1.bf16.msra.mxu0 0
    %1384 = vmatprep.subr.bf16.mxu0 0
    %1385 = vmatpush1.bf16.msra.mxu0 0
    %1386 = vmatprep.subr.bf16.mxu0 0
    %1387 = vmatpush1.bf16.msra.mxu0 0
    %1388 = vmatprep.subr.bf16.mxu0 0
    %1389 = vmatpush1.bf16.msra.mxu0 0
    %1390 = vmatprep.subr.bf16.mxu0 0
    %1391 = vmatpush1.bf16.msra.mxu0 0
    %1392 = vmatprep.subr.bf16.mxu0 0
    %1393 = vmatpush1.bf16.msra.mxu0 0
    %1394 = vmatprep.subr.bf16.mxu0 0
    %1395 = vmatpush1.bf16.msra.mxu0 0
    %1396 = vmatprep.mubr.bf16.mxu0 0
    %1397 = vmatmul.mubr.bf16.gmra.mrb[0].mxu0 %v1362
    %v1398 = vpop.f32.mrb[0].mxu0
    %v1399 = vadd.f32 0.0, %v1398
    %v1400 = vpop.f32.mrb[0].mxu0
    %v1401 = vpop.f32.mrb[0].mxu0
    %v1402 = vpop.f32.mrb[0].mxu0
    %1403 = vdwg.mxu0
    %v1404 = vadd.f32 %v1074, %v1399
    %v1405 = vxor.u32 %v1404, 2147483648
    %v1406 = vmul.f32 %v1405, 1.442695
    %v1407 = vpow.pop %v1406
    %v1408 = vadd.f32 %v1407, 1.0
    %v1409 = vrcp.pop %v1408
    %v1410 = vmul.f32 1.0, %v1409
    %v1411 = vtanh.pop %v1404
    %v1412 = vmul.f32 %v1410, %v1338
    %1414 = vrot.lane.b32.xlu0 %v1411, 64
    %v1415 = vpop.permute.xlu0 %1414
    %v1417 = vmul.f32 %v1410, %v1415
    %1419 = vrot.lane.b32.xlu0 %v1417, 32
    %v1420 = vpop.permute.xlu0 %1419
    %v1422 = vadd.f32 %v1412, %v1420
    %v1423 = vtanh.pop %v1422
    %1425 = vrot.lane.b32.xlu0 %v1423, 64
    %v1426 = vpop.permute.xlu0 %1425
    %v1428 = vmul.f32 %v1410, %v1426
    %v1431 = vunpack.c.l.s4 1983009808
    %v1432 = vunpack.c.0.s8 %v1431
    %v1433 = vlaneseq
    %v1434 = vshrl.u32 %v1433, 7
    %v1435 = vsub.s32 %v1432, %v1434
    %v1436 = vrot.slane %v1428, %v1435
    %1437 = vrot.lane.b32.xlu0 %v1436, 32
    %v1438 = vpop.permute.xlu0 %1437
    %1440 = vst.msk [vmem:[%s570] sm:$0x3] %vm315, %v1438
    %v1441 = vpack.c.bf16 %v1428, %v1428
    %1443 = vrot.lane.b32.xlu0 %v1441, 32
    %v1444 = vpop.permute.xlu0 %1443
    %v1446 = vsel %vm235, %v1444, 0
    %1448 = vmatprep.subr.bf16.mxu0 0
    %1449 = vmatpush1.bf16.msra.mxu0 %v1108
    %1450 = vmatprep.subr.bf16.mxu0 0
    %1451 = vmatpush1.bf16.msra.mxu0 %v1109
    %1452 = vmatprep.subr.bf16.mxu0 0
    %1453 = vmatpush1.bf16.msra.mxu0 0
    %1454 = vmatprep.subr.bf16.mxu0 0
    %1455 = vmatpush1.bf16.msra.mxu0 0
    %1456 = vmatprep.subr.bf16.mxu0 0
    %1457 = vmatpush1.bf16.msra.mxu0 0
    %1458 = vmatprep.subr.bf16.mxu0 0
    %1459 = vmatpush1.bf16.msra.mxu0 0
    %1460 = vmatprep.subr.bf16.mxu0 0
    %1461 = vmatpush1.bf16.msra.mxu0 0
    %1462 = vmatprep.subr.bf16.mxu0 0
    %1463 = vmatpush1.bf16.msra.mxu0 0
    %1464 = vmatprep.subr.bf16.mxu0 0
    %1465 = vmatpush1.bf16.msra.mxu0 0
    %1466 = vmatprep.subr.bf16.mxu0 0
    %1467 = vmatpush1.bf16.msra.mxu0 0
    %1468 = vmatprep.subr.bf16.mxu0 0
    %1469 = vmatpush1.bf16.msra.mxu0 0
    %1470 = vmatprep.subr.bf16.mxu0 0
    %1471 = vmatpush1.bf16.msra.mxu0 0
    %1472 = vmatprep.subr.bf16.mxu0 0
    %1473 = vmatpush1.bf16.msra.mxu0 0
    %1474 = vmatprep.subr.bf16.mxu0 0
    %1475 = vmatpush1.bf16.msra.mxu0 0
    %1476 = vmatprep.subr.bf16.mxu0 0
    %1477 = vmatpush1.bf16.msra.mxu0 0
    %1478 = vmatprep.subr.bf16.mxu0 0
    %1479 = vmatpush1.bf16.msra.mxu0 0
    %1480 = vmatprep.mubr.bf16.mxu0 0
    %1481 = vmatmul.mubr.bf16.gmra.mrb[0].mxu0 %v1446
    %v1482 = vpop.f32.mrb[0].mxu0
    %v1483 = vadd.f32 0.0, %v1482
    %v1484 = vpop.f32.mrb[0].mxu0
    %v1485 = vpop.f32.mrb[0].mxu0
    %v1486 = vpop.f32.mrb[0].mxu0
    %1487 = vdwg.mxu0
    %v1488 = vadd.f32 %v1082, %v1483
    %v1489 = vxor.u32 %v1488, 2147483648
    %v1490 = vmul.f32 %v1489, 1.442695
    %v1491 = vpow.pop %v1490
    %v1492 = vadd.f32 %v1491, 1.0
    %v1493 = vrcp.pop %v1492
    %v1494 = vmul.f32 1.0, %v1493
    %v1495 = vtanh.pop %v1488
    %v1496 = vmul.f32 %v1494, %v1422
    %1498 = vrot.lane.b32.xlu0 %v1495, 64
    %v1499 = vpop.permute.xlu0 %1498
    %v1501 = vmul.f32 %v1494, %v1499
    %1503 = vrot.lane.b32.xlu0 %v1501, 32
    %v1504 = vpop.permute.xlu0 %1503
    %v1506 = vadd.f32 %v1496, %v1504
    %v1507 = vtanh.pop %v1506
    %1509 = vrot.lane.b32.xlu0 %v1507, 64
    %v1510 = vpop.permute.xlu0 %1509
    %v1512 = vmul.f32 %v1494, %v1510
    %v1515 = vunpack.c.l.s4 1983009808
    %v1516 = vunpack.c.0.s8 %v1515
    %v1517 = vlaneseq
    %v1518 = vshrl.u32 %v1517, 7
    %v1519 = vsub.s32 %v1516, %v1518
    %v1520 = vrot.slane %v1512, %v1519
    %1521 = vrot.lane.b32.xlu0 %v1520, 32
    %v1522 = vpop.permute.xlu0 %1521
    %1524 = vst.msk [vmem:[%s655] sm:$0x3] %vm315, %v1522
    %v1525 = vpack.c.bf16 %v1512, %v1512
    %1527 = vrot.lane.b32.xlu0 %v1525, 32
    %v1528 = vpop.permute.xlu0 %1527
    %v1530 = vsel %vm235, %v1528, 0
    %1532 = vmatprep.subr.bf16.mxu0 0
    %1533 = vmatpush1.bf16.msra.mxu0 %v1108
    %1534 = vmatprep.subr.bf16.mxu0 0
    %1535 = vmatpush1.bf16.msra.mxu0 %v1109
    %1536 = vmatprep.subr.bf16.mxu0 0
    %1537 = vmatpush1.bf16.msra.mxu0 0
    %1538 = vmatprep.subr.bf16.mxu0 0
    %1539 = vmatpush1.bf16.msra.mxu0 0
    %1540 = vmatprep.subr.bf16.mxu0 0
    %1541 = vmatpush1.bf16.msra.mxu0 0
    %1542 = vmatprep.subr.bf16.mxu0 0
    %1543 = vmatpush1.bf16.msra.mxu0 0
    %1544 = vmatprep.subr.bf16.mxu0 0
    %1545 = vmatpush1.bf16.msra.mxu0 0
    %1546 = vmatprep.subr.bf16.mxu0 0
    %1547 = vmatpush1.bf16.msra.mxu0 0
    %1548 = vmatprep.subr.bf16.mxu0 0
    %1549 = vmatpush1.bf16.msra.mxu0 0
    %1550 = vmatprep.subr.bf16.mxu0 0
    %1551 = vmatpush1.bf16.msra.mxu0 0
    %1552 = vmatprep.subr.bf16.mxu0 0
    %1553 = vmatpush1.bf16.msra.mxu0 0
    %1554 = vmatprep.subr.bf16.mxu0 0
    %1555 = vmatpush1.bf16.msra.mxu0 0
    %1556 = vmatprep.subr.bf16.mxu0 0
    %1557 = vmatpush1.bf16.msra.mxu0 0
    %1558 = vmatprep.subr.bf16.mxu0 0
    %1559 = vmatpush1.bf16.msra.mxu0 0
    %1560 = vmatprep.subr.bf16.mxu0 0
    %1561 = vmatpush1.bf16.msra.mxu0 0
    %1562 = vmatprep.subr.bf16.mxu0 0
    %1563 = vmatpush1.bf16.msra.mxu0 0
    %1564 = vmatprep.mubr.bf16.mxu0 0
    %1565 = vmatmul.mubr.bf16.gmra.mrb[0].mxu0 %v1530
    %v1566 = vpop.f32.mrb[0].mxu0
    %v1567 = vadd.f32 0.0, %v1566
    %v1568 = vpop.f32.mrb[0].mxu0
    %v1569 = vpop.f32.mrb[0].mxu0
    %v1570 = vpop.f32.mrb[0].mxu0
    %1571 = vdwg.mxu0
    %v1572 = vadd.f32 %v1090, %v1567
    %v1573 = vxor.u32 %v1572, 2147483648
    %v1574 = vmul.f32 %v1573, 1.442695
    %v1575 = vpow.pop %v1574
    %v1576 = vadd.f32 %v1575, 1.0
    %v1577 = vrcp.pop %v1576
    %v1578 = vmul.f32 1.0, %v1577
    %v1579 = vtanh.pop %v1572
    %v1580 = vmul.f32 %v1578, %v1506
    %1582 = vrot.lane.b32.xlu0 %v1579, 64
    %v1583 = vpop.permute.xlu0 %1582
    %v1585 = vmul.f32 %v1578, %v1583
    %1587 = vrot.lane.b32.xlu0 %v1585, 32
    %v1588 = vpop.permute.xlu0 %1587
    %v1590 = vadd.f32 %v1580, %v1588
    %v1591 = vtanh.pop %v1590
    %1593 = vrot.lane.b32.xlu0 %v1591, 64
    %v1594 = vpop.permute.xlu0 %1593
    %v1596 = vmul.f32 %v1578, %v1594
    %v1599 = vunpack.c.l.s4 1983009808
    %v1600 = vunpack.c.0.s8 %v1599
    %v1601 = vlaneseq
    %v1602 = vshrl.u32 %v1601, 7
    %v1603 = vsub.s32 %v1600, %v1602
    %v1604 = vrot.slane %v1596, %v1603
    %1605 = vrot.lane.b32.xlu0 %v1604, 32
    %v1606 = vpop.permute.xlu0 %1605
    %1608 = vst.msk [vmem:[%s740] sm:$0x3] %vm315, %v1606
    %v1609 = vpack.c.bf16 %v1596, %v1596
    %1611 = vrot.lane.b32.xlu0 %v1609, 32
    %v1612 = vpop.permute.xlu0 %1611
    %v1614 = vsel %vm235, %v1612, 0
    %1616 = vmatprep.subr.bf16.mxu0 0
    %1617 = vmatpush1.bf16.msra.mxu0 %v1108
    %1618 = vmatprep.subr.bf16.mxu0 0
    %1619 = vmatpush1.bf16.msra.mxu0 %v1109
    %1620 = vmatprep.subr.bf16.mxu0 0
    %1621 = vmatpush1.bf16.msra.mxu0 0
    %1622 = vmatprep.subr.bf16.mxu0 0
    %1623 = vmatpush1.bf16.msra.mxu0 0
    %1624 = vmatprep.subr.bf16.mxu0 0
    %1625 = vmatpush1.bf16.msra.mxu0 0
    %1626 = vmatprep.subr.bf16.mxu0 0
    %1627 = vmatpush1.bf16.msra.mxu0 0
    %1628 = vmatprep.subr.bf16.mxu0 0
    %1629 = vmatpush1.bf16.msra.mxu0 0
    %1630 = vmatprep.subr.bf16.mxu0 0
    %1631 = vmatpush1.bf16.msra.mxu0 0
    %1632 = vmatprep.subr.bf16.mxu0 0
    %1633 = vmatpush1.bf16.msra.mxu0 0
    %1634 = vmatprep.subr.bf16.mxu0 0
    %1635 = vmatpush1.bf16.msra.mxu0 0
    %1636 = vmatprep.subr.bf16.mxu0 0
    %1637 = vmatpush1.bf16.msra.mxu0 0
    %1638 = vmatprep.subr.bf16.mxu0 0
    %1639 = vmatpush1.bf16.msra.mxu0 0
    %1640 = vmatprep.subr.bf16.mxu0 0
    %1641 = vmatpush1.bf16.msra.mxu0 0
    %1642 = vmatprep.subr.bf16.mxu0 0
    %1643 = vmatpush1.bf16.msra.mxu0 0
    %1644 = vmatprep.subr.bf16.mxu0 0
    %1645 = vmatpush1.bf16.msra.mxu0 0
    %1646 = vmatprep.subr.bf16.mxu0 0
    %1647 = vmatpush1.bf16.msra.mxu0 0
    %1648 = vmatprep.mubr.bf16.mxu0 0
    %1649 = vmatmul.mubr.bf16.gmra.mrb[0].mxu0 %v1614
    %v1650 = vpop.f32.mrb[0].mxu0
    %v1651 = vadd.f32 0.0, %v1650
    %v1652 = vpop.f32.mrb[0].mxu0
    %v1653 = vpop.f32.mrb[0].mxu0
    %v1654 = vpop.f32.mrb[0].mxu0
    %1655 = vdwg.mxu0
    %v1656 = vadd.f32 %v1089, %v1651
    %v1657 = vxor.u32 %v1656, 2147483648
    %v1658 = vmul.f32 %v1657, 1.442695
    %v1659 = vpow.pop %v1658
    %v1660 = vadd.f32 %v1659, 1.0
    %v1661 = vrcp.pop %v1660
    %v1662 = vmul.f32 1.0, %v1661
    %v1663 = vtanh.pop %v1656
    %v1664 = vmul.f32 %v1662, %v1590
    %1666 = vrot.lane.b32.xlu0 %v1663, 64
    %v1667 = vpop.permute.xlu0 %1666
    %v1669 = vmul.f32 %v1662, %v1667
    %1671 = vrot.lane.b32.xlu0 %v1669, 32
    %v1672 = vpop.permute.xlu0 %1671
    %v1674 = vadd.f32 %v1664, %v1672
    %v1675 = vtanh.pop %v1674
    %1677 = vrot.lane.b32.xlu0 %v1675, 64
    %v1678 = vpop.permute.xlu0 %1677
    %v1680 = vmul.f32 %v1662, %v1678
    %v1683 = vunpack.c.l.s4 1983009808
    %v1684 = vunpack.c.0.s8 %v1683
    %v1685 = vlaneseq
    %v1686 = vshrl.u32 %v1685, 7
    %v1687 = vsub.s32 %v1684, %v1686
    %v1688 = vrot.slane %v1680, %v1687
    %1689 = vrot.lane.b32.xlu0 %v1688, 32
    %v1690 = vpop.permute.xlu0 %1689
    %1692 = vst.msk [vmem:[%s825] sm:$0x3] %vm315, %v1690
    %v1693 = vpack.c.bf16 %v1680, %v1680
    %1695 = vrot.lane.b32.xlu0 %v1693, 32
    %v1696 = vpop.permute.xlu0 %1695
    %v1698 = vsel %vm235, %v1696, 0
    %1700 = vmatprep.subr.bf16.mxu0 0
    %1701 = vmatpush1.bf16.msra.mxu0 %v1108
    %1702 = vmatprep.subr.bf16.mxu0 0
    %1703 = vmatpush1.bf16.msra.mxu0 %v1109
    %1704 = vmatprep.subr.bf16.mxu0 0
    %1705 = vmatpush1.bf16.msra.mxu0 0
    %1706 = vmatprep.subr.bf16.mxu0 0
    %1707 = vmatpush1.bf16.msra.mxu0 0
    %1708 = vmatprep.subr.bf16.mxu0 0
    %1709 = vmatpush1.bf16.msra.mxu0 0
    %1710 = vmatprep.subr.bf16.mxu0 0
    %1711 = vmatpush1.bf16.msra.mxu0 0
    %1712 = vmatprep.subr.bf16.mxu0 0
    %1713 = vmatpush1.bf16.msra.mxu0 0
    %1714 = vmatprep.subr.bf16.mxu0 0
    %1715 = vmatpush1.bf16.msra.mxu0 0
    %1716 = vmatprep.subr.bf16.mxu0 0
    %1717 = vmatpush1.bf16.msra.mxu0 0
    %1718 = vmatprep.subr.bf16.mxu0 0
    %1719 = vmatpush1.bf16.msra.mxu0 0
    %1720 = vmatprep.subr.bf16.mxu0 0
    %1721 = vmatpush1.bf16.msra.mxu0 0
    %1722 = vmatprep.subr.bf16.mxu0 0
    %1723 = vmatpush1.bf16.msra.mxu0 0
    %1724 = vmatprep.subr.bf16.mxu0 0
    %1725 = vmatpush1.bf16.msra.mxu0 0
    %1726 = vmatprep.subr.bf16.mxu0 0
    %1727 = vmatpush1.bf16.msra.mxu0 0
    %1728 = vmatprep.subr.bf16.mxu0 0
    %1729 = vmatpush1.bf16.msra.mxu0 0
    %1730 = vmatprep.subr.bf16.mxu0 0
    %1731 = vmatpush1.bf16.msra.mxu0 0
    %1732 = vmatprep.mubr.bf16.mxu0 0
    %1733 = vmatmul.mubr.bf16.gmra.mrb[0].mxu0 %v1698
    %v1734 = vpop.f32.mrb[0].mxu0
    %v1735 = vadd.f32 0.0, %v1734
    %v1736 = vpop.f32.mrb[0].mxu0
    %v1737 = vpop.f32.mrb[0].mxu0
    %v1738 = vpop.f32.mrb[0].mxu0
    %1739 = vdwg.mxu0
    %v1740 = vadd.f32 %v1091, %v1735
    %v1741 = vxor.u32 %v1740, 2147483648
    %v1742 = vmul.f32 %v1741, 1.442695
    %v1743 = vpow.pop %v1742
    %v1744 = vadd.f32 %v1743, 1.0
    %v1745 = vrcp.pop %v1744
    %v1746 = vmul.f32 1.0, %v1745
    %v1747 = vtanh.pop %v1740
    %v1748 = vmul.f32 %v1746, %v1674
    %1750 = vrot.lane.b32.xlu0 %v1747, 64
    %v1751 = vpop.permute.xlu0 %1750
    %v1753 = vmul.f32 %v1746, %v1751
    %1755 = vrot.lane.b32.xlu0 %v1753, 32
    %v1756 = vpop.permute.xlu0 %1755
    %v1758 = vadd.f32 %v1748, %v1756
    %v1759 = vtanh.pop %v1758
    %1761 = vrot.lane.b32.xlu0 %v1759, 64
    %v1762 = vpop.permute.xlu0 %1761
    %v1764 = vmul.f32 %v1746, %v1762
    %v1767 = vunpack.c.l.s4 1983009808
    %v1768 = vunpack.c.0.s8 %v1767
    %v1769 = vlaneseq
    %v1770 = vshrl.u32 %v1769, 7
    %v1771 = vsub.s32 %v1768, %v1770
    %v1772 = vrot.slane %v1764, %v1771
    %1773 = vrot.lane.b32.xlu0 %v1772, 32
    %v1774 = vpop.permute.xlu0 %1773
    %1776 = vst.msk [vmem:[%s910] sm:$0x3] %vm315, %v1774
    %v1777 = vld [vmem:[#allocation2] sm:$0x3]
    %v1778 = vld [vmem:[#allocation2 + $0x2] sm:$0x3]
    %v1779 = vld [vmem:[#allocation2 + $0x4] sm:$0x3]
    %v1780 = vld [vmem:[#allocation2 + $0x6] sm:$0x3]
    %v1781 = vld [vmem:[#allocation2 + $0x8] sm:$0x3]
    %v1782 = vld [vmem:[#allocation2 + $0xa] sm:$0x3]
    %v1783 = vld [vmem:[#allocation2 + $0xc] sm:$0x3]
    %v1784 = vld [vmem:[#allocation2 + $0xe] sm:$0x3]
    %v1785 = vpack.c.bf16 %v1777, %v1777
    %v1786 = vpack.c.bf16 %v1778, %v1778
    %v1787 = vpack.c.bf16 %v1779, %v1779
    %v1788 = vpack.c.bf16 %v1780, %v1780
    %v1789 = vpack.c.bf16 %v1781, %v1781
    %v1790 = vpack.c.bf16 %v1782, %v1782
    %v1791 = vpack.c.bf16 %v1783, %v1783
    %v1792 = vpack.c.bf16 %v1784, %v1784
    %v1793 = vld [vmem:[%s7] sm:$0xf]
    %v1794 = vld [vmem:[%s7 + $0x4] sm:$0xf]
    %v1795 = vld [vmem:[%s7 + $0x8] sm:$0xf]
    %v1796 = vld [vmem:[%s7 + $0xc] sm:$0xf]
    %v1797 = vld [vmem:[#allocation3] sm:$0x1]
    %v1799 = vlaneseq
    %v1800 = vshrl.u32 %v1799, 7
    %v1801 = vsub.s32 0, %v1800
    %v1802 = vrot.slane %v1797, %v1801
    %v1812 = vcombine.low %v1785, %v1786
    %v1813 = vcombine.low %v1787, %v1788
    %v1814 = vcombine.low %v1789, %v1790
    %v1815 = vcombine.low %v1791, %v1792
    %v1817 = vunpack.c.l.s4 1966171168
    %v1818 = vunpack.c.0.s8 %v1817
    %v1819 = vlaneseq
    %v1820 = vshrl.u32 %v1819, 7
    %v1821 = vsub.s32 %v1818, %v1820
    %v1822 = vrot.slane %v1812, %v1821
    %v1824 = vunpack.c.l.s4 1966171168
    %v1825 = vunpack.c.0.s8 %v1824
    %v1826 = vlaneseq
    %v1827 = vshrl.u32 %v1826, 7
    %v1828 = vsub.s32 %v1825, %v1827
    %v1829 = vrot.slane %v1813, %v1828
    %v1831 = vunpack.c.l.s4 1966171168
    %v1832 = vunpack.c.0.s8 %v1831
    %v1833 = vlaneseq
    %v1834 = vshrl.u32 %v1833, 7
    %v1835 = vsub.s32 %v1832, %v1834
    %v1836 = vrot.slane %v1814, %v1835
    %v1838 = vunpack.c.l.s4 1966171168
    %v1839 = vunpack.c.0.s8 %v1838
    %v1840 = vlaneseq
    %v1841 = vshrl.u32 %v1840, 7
    %v1842 = vsub.s32 %v1839, %v1841
    %v1843 = vrot.slane %v1815, %v1842
    %v1844 = vcombine.low %v1822, %v1829
    %v1845 = vcombine.low %v1836, %v1843
    %v1847 = vunpack.c.l.s4 1966171168
    %v1848 = vunpack.c.0.s8 %v1847
    %v1849 = vlaneseq
    %v1850 = vshrl.u32 %v1849, 7
    %v1851 = vsub.s32 %v1848, %v1850
    %v1852 = vrot.slane %v1844, %v1851
    %v1854 = vunpack.c.l.s4 1966171168
    %v1855 = vunpack.c.0.s8 %v1854
    %v1856 = vlaneseq
    %v1857 = vshrl.u32 %v1856, 7
    %v1858 = vsub.s32 %v1855, %v1857
    %v1859 = vrot.slane %v1845, %v1858
    %v1860 = vcombine.low %v1852, %v1859
    %v1865 = vunpack.c.l.b16 %v1793
    %v1866 = vunpack.c.l.b16 %v1794
    %v1867 = vunpack.c.l.b16 %v1795
    %v1868 = vunpack.c.l.b16 %v1796
    %v1869 = vpack.c.b16 %v1866, %v1865
    %v1870 = vpack.c.b16 %v1868, %v1867
    %v1874 = vsel %vm235, %v1860, 0
    %1876 = vmatprep.subr.bf16.mxu0 0
    %1877 = vmatpush1.bf16.msra.mxu0 %v1869
    %1878 = vmatprep.subr.bf16.mxu0 0
    %1879 = vmatpush1.bf16.msra.mxu0 %v1870
    %1880 = vmatprep.subr.bf16.mxu0 0
    %1881 = vmatpush1.bf16.msra.mxu0 0
    %1882 = vmatprep.subr.bf16.mxu0 0
    %1883 = vmatpush1.bf16.msra.mxu0 0
    %1884 = vmatprep.subr.bf16.mxu0 0
    %1885 = vmatpush1.bf16.msra.mxu0 0
    %1886 = vmatprep.subr.bf16.mxu0 0
    %1887 = vmatpush1.bf16.msra.mxu0 0
    %1888 = vmatprep.subr.bf16.mxu0 0
    %1889 = vmatpush1.bf16.msra.mxu0 0
    %1890 = vmatprep.subr.bf16.mxu0 0
    %1891 = vmatpush1.bf16.msra.mxu0 0
    %1892 = vmatprep.subr.bf16.mxu0 0
    %1893 = vmatpush1.bf16.msra.mxu0 0
    %1894 = vmatprep.subr.bf16.mxu0 0
    %1895 = vmatpush1.bf16.msra.mxu0 0
    %1896 = vmatprep.subr.bf16.mxu0 0
    %1897 = vmatpush1.bf16.msra.mxu0 0
    %1898 = vmatprep.subr.bf16.mxu0 0
    %1899 = vmatpush1.bf16.msra.mxu0 0
    %1900 = vmatprep.subr.bf16.mxu0 0
    %1901 = vmatpush1.bf16.msra.mxu0 0
    %1902 = vmatprep.subr.bf16.mxu0 0
    %1903 = vmatpush1.bf16.msra.mxu0 0
    %1904 = vmatprep.subr.bf16.mxu0 0
    %1905 = vmatpush1.bf16.msra.mxu0 0
    %1906 = vmatprep.subr.bf16.mxu0 0
    %1907 = vmatpush1.bf16.msra.mxu0 0
    %1908 = vmatprep.mubr.bf16.mxu0 0
    %1909 = vmatmul.mubr.bf16.gmra.mrb[0].mxu0 %v1874
    %v1910 = vpop.f32.mrb[0].mxu0
    %v1911 = vadd.f32 %v1802, %v1910
    %v1912 = vpop.f32.mrb[0].mxu0
    %v1913 = vpop.f32.mrb[0].mxu0
    %v1914 = vadd.f32 %v1802, %v1913
    %v1915 = vpop.f32.mrb[0].mxu0
    %1916 = vdwg.mxu0
    %v1919 = vcombine.high %v1911, %v1911
    %v1921 = vunpack.c.l.s4 1983009808
    %v1922 = vunpack.c.0.s8 %v1921
    %v1923 = vlaneseq
    %v1924 = vshrl.u32 %v1923, 7
    %v1925 = vsub.s32 %v1922, %v1924
    %v1926 = vrot.slane %v1911, %v1925
    %v1928 = vunpack.c.l.s4 1983009808
    %v1929 = vunpack.c.0.s8 %v1928
    %v1930 = vlaneseq
    %v1931 = vshrl.u32 %v1930, 7
    %v1932 = vsub.s32 %v1929, %v1931
    %v1933 = vrot.slane %v1919, %v1932
    %v1934 = vcombine.high %v1926, %v1926
    %v1935 = vcombine.high %v1933, %v1933
    %v1936 = vcombine.high %v1914, %v1914
    %v1938 = vunpack.c.l.s4 1983009808
    %v1939 = vunpack.c.0.s8 %v1938
    %v1940 = vlaneseq
    %v1941 = vshrl.u32 %v1940, 7
    %v1942 = vsub.s32 %v1939, %v1941
    %v1943 = vrot.slane %v1914, %v1942
    %v1945 = vunpack.c.l.s4 1983009808
    %v1946 = vunpack.c.0.s8 %v1945
    %v1947 = vlaneseq
    %v1948 = vshrl.u32 %v1947, 7
    %v1949 = vsub.s32 %v1946, %v1948
    %v1950 = vrot.slane %v1936, %v1949
    %v1951 = vcombine.high %v1943, %v1943
    %v1952 = vcombine.high %v1950, %v1950
    %vm1961 = vcmask 58368
    %1962 = vst.msk [vmem:[%s9] sm:$0x3] %vm1961, %v1926
    %1963 = vst.msk [vmem:[%s9 + $0x2] sm:$0x3] %vm1961, %v1934
    %1964 = vst.msk [vmem:[%s9 + $0x4] sm:$0x3] %vm1961, %v1933
    %1965 = vst.msk [vmem:[%s9 + $0x6] sm:$0x3] %vm1961, %v1935
    %1966 = vst.msk [vmem:[%s9 + $0x8] sm:$0x3] %vm1961, %v1943
    %1967 = vst.msk [vmem:[%s9 + $0xa] sm:$0x3] %vm1961, %v1951
    %1968 = vst.msk [vmem:[%s9 + $0xc] sm:$0x3] %vm1961, %v1950
    %1969 = vst.msk [vmem:[%s9 + $0xe] sm:$0x3] %vm1961, %v1952
    // Predicated region
    $region42: #{model_forward.1} parent=1 // pred_check
      _
    $region43: #{model_forward.1} parent=1 // pred_check_branch
      %1971 = sbr.rel (0) target = $region45
    $region44: #{model_forward.1} parent=1 // pred_region
      _
    $region45: #{model_forward.1} parent=1 // pred_fallthru
      _
    // Predicated region
    $region46: #{model_forward.1} parent=1 // pred_check
      _
    $region47: #{model_forward.1} parent=1 // pred_check_branch
      %1973 = sbr.rel (0) target = $region49
    $region48: #{model_forward.1} parent=1 // pred_region
      _
    $region49: #{model_forward.1} parent=1 // pred_fallthru
      _
    %1974 = vsyncpa [#allocation4], 1

</llo_original>
